<compile_context>
chip_gen: v5e
topology: v5e:2x2
jax: 0.10.0
libtpu: 0.0.40
codegen_flags: <defaults>
</compile_context>

<pallas_src>
import functools

import jax
import jax.numpy as jnp
from jax.experimental import pallas as pl
from jax.experimental.pallas import tpu as pltpu


def _round_up(v, m):
    return ((v + m - 1) // m) * m


def _pad_to(a, axis, target):
    cur = a.shape[axis]
    if cur >= target:
        return a
    widths = [(0, 0)] * a.ndim
    widths[axis] = (0, target - cur)
    return jnp.pad(a, widths)


def _mlp_para_kernel(
    x_ref, w_ref, xp_ref,
    w1a_ref, b1a_ref, w1b_ref, b1b_ref,
    w2a_ref, b2a_ref, w2b_ref, b2b_ref,
    gamma_ref, beta_ref,
    w3a_ref, b3a_ref, w3b_ref, b3b_ref,
    out_ref,
    *, ln_eps: float, d_real: int,
):
    f32 = jnp.float32
    bf16 = jnp.bfloat16

    bt, mp, dp = x_ref.shape
    np_ = xp_ref.shape[-1]

    # ---- branch 1: layers_1(x), flattened over the batch tile -> (bt*mp, dp) ----
    x2d = x_ref[...].reshape(bt * mp, dp)
    h1 = jnp.dot(x2d, w1a_ref[...], preferred_element_type=f32) + b1a_ref[...]
    h1 = jnp.maximum(h1, 0.0)
    x1 = jnp.dot(h1.astype(bf16), w1b_ref[...], preferred_element_type=f32) + b1b_ref[...]

    # ---- branch 2: layer_norm(layers_2(w)), flattened -> (bt*dp, dp) ----
    w2d = w_ref[...].reshape(bt * dp, dp)
    h2 = jnp.dot(w2d, w2a_ref[...], preferred_element_type=f32) + b2a_ref[...]
    h2 = jnp.maximum(h2, 0.0)
    w2 = jnp.dot(h2.astype(bf16), w2b_ref[...], preferred_element_type=f32) + b2b_ref[...]
    # Fused one-pass stats in f32 over the REAL feature count; padded lanes of w2
    # are exactly zero, so plain sums over the padded axis are correct.
    inv_d = 1.0 / float(d_real)
    mu = jnp.sum(w2, axis=-1, keepdims=True) * inv_d
    ex2 = jnp.sum(w2 * w2, axis=-1, keepdims=True) * inv_d
    var = ex2 - mu * mu
    w_ln = (w2 - mu) * jax.lax.rsqrt(var + ln_eps) * gamma_ref[...] + beta_ref[...]

    # ---- branch 3: layers_3(x_prime), flattened -> (bt*dp, np_) ----
    xp2d = xp_ref[...].reshape(bt * dp, np_)
    h3 = jnp.dot(xp2d, w3a_ref[...], preferred_element_type=f32) + b3a_ref[...]
    h3 = jnp.maximum(h3, 0.0)
    xp3 = jnp.dot(h3.astype(bf16), w3b_ref[...], preferred_element_type=f32) + b3b_ref[...]

    # ---- two batched matmuls over the batch tile (bf16 operands, f32 accumulate) ----
    x1_b = x1.astype(bf16).reshape(bt, mp, dp)
    wln_b = w_ln.astype(bf16).reshape(bt, dp, dp)
    xp3_b = xp3.astype(bf16).reshape(bt, dp, np_)
    y = jnp.einsum("bmd,bde->bme", x1_b, wln_b, preferred_element_type=f32)
    out = jnp.einsum("bme,ben->bmn", y.astype(bf16), xp3_b, preferred_element_type=f32)
    out_ref[...] = out.astype(out_ref.dtype)


def mlp_para_forward(x, w, x_prime, params, *, batch_tile=None, lane=128, sublane=8):
    """Pallas forward of MLP_para. x:(B,M,D)  w:(B,D,D)  x_prime:(B,D,N) -> (B,M,N)."""
    B, M, D = x.shape
    _, _, N = x_prime.shape
    (w1a, b1a, w1b, b1b,
     w2a, b2a, w2b, b2b,
     gamma, beta,
     w3a, b3a, w3b, b3b) = params

    ln_eps = float(D)  # nn.LayerNorm(d_length, d_length): second positional arg is eps

    Mp = _round_up(M, sublane)
    Dp = _round_up(D, lane)
    Np = _round_up(N, lane)
    H1p = _round_up(w1a.shape[1], lane)
    H2p = _round_up(w2a.shape[1], lane)
    H3p = _round_up(w3a.shape[1], lane)

    bf16, f32 = jnp.bfloat16, jnp.float32

    # --- lane-dense zero padding + bf16 casts (exact: padded weights / biases = 0,
    #     ReLU(0) = 0, and padded contraction rows of the second linear are 0) ---
    x_p = _pad_to(_pad_to(x, 2, Dp), 1, Mp).astype(bf16)          # (B, Mp, Dp)
    w_p = _pad_to(_pad_to(w, 2, Dp), 1, Dp).astype(bf16)          # (B, Dp, Dp)
    xp_p = _pad_to(_pad_to(x_prime, 2, Np), 1, Dp).astype(bf16)   # (B, Dp, Np)

    w1a_p = _pad_to(_pad_to(w1a, 0, Dp), 1, H1p).astype(bf16)     # (Dp, H1p)
    b1a_p = _pad_to(b1a, 1, H1p).astype(f32)                      # (1, H1p)
    w1b_p = _pad_to(_pad_to(w1b, 0, H1p), 1, Dp).astype(bf16)     # (H1p, Dp)
    b1b_p = _pad_to(b1b, 1, Dp).astype(f32)                       # (1, Dp)

    w2a_p = _pad_to(_pad_to(w2a, 0, Dp), 1, H2p).astype(bf16)     # (Dp, H2p)
    b2a_p = _pad_to(b2a, 1, H2p).astype(f32)                      # (1, H2p)
    w2b_p = _pad_to(_pad_to(w2b, 0, H2p), 1, Dp).astype(bf16)     # (H2p, Dp)
    b2b_p = _pad_to(b2b, 1, Dp).astype(f32)                       # (1, Dp)
    gamma_p = _pad_to(gamma, 1, Dp).astype(f32)                   # (1, Dp) -- padded lanes = 0
    beta_p = _pad_to(beta, 1, Dp).astype(f32)                     # (1, Dp)

    w3a_p = _pad_to(_pad_to(w3a, 0, Np), 1, H3p).astype(bf16)     # (Np, H3p)
    b3a_p = _pad_to(b3a, 1, H3p).astype(f32)                      # (1, H3p)
    w3b_p = _pad_to(_pad_to(w3b, 0, H3p), 1, Np).astype(bf16)     # (H3p, Np)
    b3b_p = _pad_to(b3b, 1, Np).astype(f32)                       # (1, Np)

    # --- batch tiling: >= 2 parallel tiles when possible so both v7x TCs are busy ---
    if batch_tile is None:
        batch_tile = B // 2 if (B > 1 and B % 2 == 0) else B
    assert B % batch_tile == 0, "batch must be divisible by batch_tile"
    grid = (B // batch_tile,)

    kernel = functools.partial(_mlp_para_kernel, ln_eps=ln_eps, d_real=D)

    def batched(shape):
        return pl.BlockSpec((batch_tile,) + shape, lambda b: (b, 0, 0))

    def whole(arr):
        # Constant index_map across grid steps: Pallas skips the re-copy when the
        # block index does not change (weights are resident across batch tiles).
        return pl.BlockSpec(arr.shape, lambda b: (0,) * arr.ndim)

    in_specs = [
        batched((Mp, Dp)),   # x
        batched((Dp, Dp)),   # w
        batched((Dp, Np)),   # x_prime
        whole(w1a_p), whole(b1a_p), whole(w1b_p), whole(b1b_p),
        whole(w2a_p), whole(b2a_p), whole(w2b_p), whole(b2b_p),
        whole(gamma_p), whole(beta_p),
        whole(w3a_p), whole(b3a_p), whole(w3b_p), whole(b3b_p),
    ]

    out_padded = pl.pallas_call(
        kernel,
        out_shape=jax.ShapeDtypeStruct((B, Mp, Np), f32),
        grid_spec=pltpu.PrefetchScalarGridSpec(
            num_scalar_prefetch=0,
            grid=grid,
            in_specs=in_specs,
            out_specs=batched((Mp, Np)),   # lane-dense (Np = multiple of 128) stores
        ),
        compiler_params=pltpu.CompilerParams(
            dimension_semantics=("parallel",),
        ),
    )(x_p, w_p, xp_p,
      w1a_p, b1a_p, w1b_p, b1b_p,
      w2a_p, b2a_p, w2b_p, b2b_p,
      gamma_p, beta_p,
      w3a_p, b3a_p, w3b_p, b3b_p)

    return out_padded[:, :M, :N]


def init_params(key, d_length, d_mlp, number_shapes):
    """Deterministic parameter init. Linear weights stored as (in, out) so the
    kernel computes x @ W + b (equivalent to PyTorch's x @ weight.T + bias)."""
    ks = jax.random.split(key, 12)
    s = 0.1

    def lin(k_w, k_b, fin, fout):
        W = s * jax.random.normal(k_w, (fin, fout), jnp.float32)
        b = s * jax.random.normal(k_b, (1, fout), jnp.float32)
        return W, b

    w1a, b1a = lin(ks[0], ks[1], d_length, d_mlp[0])
    w1b, b1b = lin(ks[2], ks[3], d_mlp[0], d_length)
    w2a, b2a = lin(ks[4], ks[5], d_length, d_mlp[1])
    w2b, b2b = lin(ks[6], ks[7], d_mlp[1], d_length)
    w3a, b3a = lin(ks[8], ks[9], number_shapes, d_mlp[2])
    w3b, b3b = lin(ks[10], ks[11], d_mlp[2], number_shapes)
    gamma = jnp.ones((1, d_length), jnp.float32)   # nn.LayerNorm default affine init
    beta = jnp.zeros((1, d_length), jnp.float32)
    return (w1a, b1a, w1b, b1b,
            w2a, b2a, w2b, b2b,
            gamma, beta,
            w3a, b3a, w3b, b3b)


def reference_forward(x, w, x_prime, params, d_length):
    """Pure-JAX (f32) reference mirroring the PyTorch forward."""
    (w1a, b1a, w1b, b1b,
     w2a, b2a, w2b, b2b,
     gamma, beta,
     w3a, b3a, w3b, b3b) = params
    eps = float(d_length)

    x1 = jnp.maximum(x @ w1a + b1a, 0.0) @ w1b + b1b
    w2 = jnp.maximum(w @ w2a + b2a, 0.0) @ w2b + b2b
    mu = jnp.mean(w2, axis=-1, keepdims=True)
    var = jnp.mean((w2 - mu) ** 2, axis=-1, keepdims=True)
    w_ln = (w2 - mu) / jnp.sqrt(var + eps) * gamma + beta
    xp3 = jnp.maximum(x_prime @ w3a + b3a, 0.0) @ w3b + b3b
    y = jnp.einsum("bmd,bde->bme", x1, w_ln)
    return jnp.einsum("bme,ben->bmn", y, xp3)


if __name__ == "__main__":
    # Small, forward-consistent shapes.
    B = 2              # batch
    M = 8              # rows of x
    d_length = 16      # D
    number_shapes = 8  # N
    d_mlp = [64, 16, 64]

    key = jax.random.PRNGKey(0)
    k_x, k_w, k_xp, k_p = jax.random.split(key, 4)

    x = jax.random.normal(k_x, (B, M, d_length), jnp.float32)
    w = jax.random.normal(k_w, (B, d_length, d_length), jnp.float32)
    x_prime = jax.random.normal(k_xp, (B, d_length, number_shapes), jnp.float32)

    params = init_params(k_p, d_length, d_mlp, number_shapes)

    out = mlp_para_forward(x, w, x_prime, params)
    out = jax.block_until_ready(out)

    ref = reference_forward(x, w, x_prime, params, d_length)
    assert out.shape == (B, M, number_shapes)
    # bf16 MXU operands (f32 accumulation) -> slightly looser tolerance than all-f32.
    assert jnp.allclose(out, ref, atol=2e-2, rtol=2e-2), "mismatch vs JAX reference"

    print("KERNEL_OK")
</pallas_src>

<mosaic_0001>
module attributes {stable_mosaic.version = 11 : i64} {
  func.func @_mlp_para_kernel(%arg0: i32, %arg1: memref<1x8x128xbf16, #tpu.memory_space<vmem>>, %arg2: memref<1x128x128xbf16, #tpu.memory_space<vmem>>, %arg3: memref<1x128x128xbf16, #tpu.memory_space<vmem>>, %arg4: memref<128x128xbf16, #tpu.memory_space<vmem>>, %arg5: memref<1x128xf32, #tpu.memory_space<vmem>>, %arg6: memref<128x128xbf16, #tpu.memory_space<vmem>>, %arg7: memref<1x128xf32, #tpu.memory_space<vmem>>, %arg8: memref<128x128xbf16, #tpu.memory_space<vmem>>, %arg9: memref<1x128xf32, #tpu.memory_space<vmem>>, %arg10: memref<128x128xbf16, #tpu.memory_space<vmem>>, %arg11: memref<1x128xf32, #tpu.memory_space<vmem>>, %arg12: memref<1x128xf32, #tpu.memory_space<vmem>>, %arg13: memref<1x128xf32, #tpu.memory_space<vmem>>, %arg14: memref<128x128xbf16, #tpu.memory_space<vmem>>, %arg15: memref<1x128xf32, #tpu.memory_space<vmem>>, %arg16: memref<128x128xbf16, #tpu.memory_space<vmem>>, %arg17: memref<1x128xf32, #tpu.memory_space<vmem>>, %arg18: memref<1x8x128xf32, #tpu.memory_space<vmem>>) attributes {dimension_semantics = [#tpu.dimension_semantics<parallel>], iteration_bounds = array<i64: 2>, scalar_prefetch = 0 : i64, scratch_operands = 0 : i64, tpu.core_type = #tpu.core_type<tc>, window_params = [{transform_indices = @transform_0, window_bounds = array<i64: 1, 8, 128>}, {transform_indices = @transform_1, window_bounds = array<i64: 1, 128, 128>}, {transform_indices = @transform_2, window_bounds = array<i64: 1, 128, 128>}, {pipeline_mode = #tpu.pipeline_mode<synchronous>, transform_indices = @transform_3, window_bounds = array<i64: 128, 128>}, {pipeline_mode = #tpu.pipeline_mode<synchronous>, transform_indices = @transform_4, window_bounds = array<i64: 1, 128>}, {pipeline_mode = #tpu.pipeline_mode<synchronous>, transform_indices = @transform_5, window_bounds = array<i64: 128, 128>}, {pipeline_mode = #tpu.pipeline_mode<synchronous>, transform_indices = @transform_6, window_bounds = array<i64: 1, 128>}, {pipeline_mode = #tpu.pipeline_mode<synchronous>, transform_indices = @transform_7, window_bounds = array<i64: 128, 128>}, {pipeline_mode = #tpu.pipeline_mode<synchronous>, transform_indices = @transform_8, window_bounds = array<i64: 1, 128>}, {pipeline_mode = #tpu.pipeline_mode<synchronous>, transform_indices = @transform_9, window_bounds = array<i64: 128, 128>}, {pipeline_mode = #tpu.pipeline_mode<synchronous>, transform_indices = @transform_10, window_bounds = array<i64: 1, 128>}, {pipeline_mode = #tpu.pipeline_mode<synchronous>, transform_indices = @transform_11, window_bounds = array<i64: 1, 128>}, {pipeline_mode = #tpu.pipeline_mode<synchronous>, transform_indices = @transform_12, window_bounds = array<i64: 1, 128>}, {pipeline_mode = #tpu.pipeline_mode<synchronous>, transform_indices = @transform_13, window_bounds = array<i64: 128, 128>}, {pipeline_mode = #tpu.pipeline_mode<synchronous>, transform_indices = @transform_14, window_bounds = array<i64: 1, 128>}, {pipeline_mode = #tpu.pipeline_mode<synchronous>, transform_indices = @transform_15, window_bounds = array<i64: 128, 128>}, {pipeline_mode = #tpu.pipeline_mode<synchronous>, transform_indices = @transform_16, window_bounds = array<i64: 1, 128>}, {transform_indices = @transform_17, window_bounds = array<i64: 1, 8, 128>}]} {
    %c0 = arith.constant 0 : index
    %c0_0 = arith.constant 0 : index
    %c0_1 = arith.constant 0 : index
    %0 = vector.load %arg1[%c0, %c0_0, %c0_1] : memref<1x8x128xbf16, #tpu.memory_space<vmem>>, vector<1x8x128xbf16>
    %1 = vector.shape_cast %0 : vector<1x8x128xbf16> to vector<8x128xbf16>
    %c0_2 = arith.constant 0 : index
    %c0_3 = arith.constant 0 : index
    %2 = vector.load %arg4[%c0_2, %c0_3] : memref<128x128xbf16, #tpu.memory_space<vmem>>, vector<128x128xbf16>
    %cst = arith.constant dense<0.000000e+00> : vector<8x128xf32>
    %3 = tpu.matmul %1, %2, %cst {dimension_numbers = #tpu.dot_dimension_numbers<[1], [0], [0], [1], [0, 0, 1, 1], [], []>} : vector<8x128xbf16>, vector<128x128xbf16>, vector<8x128xf32> -> vector<8x128xf32>
    %c0_4 = arith.constant 0 : index
    %c0_5 = arith.constant 0 : index
    %4 = vector.load %arg5[%c0_4, %c0_5] : memref<1x128xf32, #tpu.memory_space<vmem>>, vector<1x128xf32>
    %5 = vector.broadcast %4 : vector<1x128xf32> to vector<8x128xf32>
    %6 = arith.addf %3, %5 : vector<8x128xf32>
    %cst_6 = arith.constant 0.000000e+00 : f32
    %7 = vector.broadcast %cst_6 : f32 to vector<8x128xf32>
    %8 = arith.maximumf %6, %7 : vector<8x128xf32>
    %9 = arith.truncf %8 : vector<8x128xf32> to vector<8x128xbf16>
    %c0_7 = arith.constant 0 : index
    %c0_8 = arith.constant 0 : index
    %10 = vector.load %arg6[%c0_7, %c0_8] : memref<128x128xbf16, #tpu.memory_space<vmem>>, vector<128x128xbf16>
    %cst_9 = arith.constant dense<0.000000e+00> : vector<8x128xf32>
    %11 = tpu.matmul %9, %10, %cst_9 {dimension_numbers = #tpu.dot_dimension_numbers<[1], [0], [0], [1], [0, 0, 1, 1], [], []>} : vector<8x128xbf16>, vector<128x128xbf16>, vector<8x128xf32> -> vector<8x128xf32>
    %c0_10 = arith.constant 0 : index
    %c0_11 = arith.constant 0 : index
    %12 = vector.load %arg7[%c0_10, %c0_11] : memref<1x128xf32, #tpu.memory_space<vmem>>, vector<1x128xf32>
    %13 = vector.broadcast %12 : vector<1x128xf32> to vector<8x128xf32>
    %14 = arith.addf %11, %13 : vector<8x128xf32>
    %c0_12 = arith.constant 0 : index
    %c0_13 = arith.constant 0 : index
    %c0_14 = arith.constant 0 : index
    %15 = vector.load %arg2[%c0_12, %c0_13, %c0_14] : memref<1x128x128xbf16, #tpu.memory_space<vmem>>, vector<1x128x128xbf16>
    %16 = vector.shape_cast %15 : vector<1x128x128xbf16> to vector<128x128xbf16>
    %c0_15 = arith.constant 0 : index
    %c0_16 = arith.constant 0 : index
    %17 = vector.load %arg8[%c0_15, %c0_16] : memref<128x128xbf16, #tpu.memory_space<vmem>>, vector<128x128xbf16>
    %cst_17 = arith.constant dense<0.000000e+00> : vector<128x128xf32>
    %18 = tpu.matmul %16, %17, %cst_17 {dimension_numbers = #tpu.dot_dimension_numbers<[1], [0], [0], [1], [0, 0, 1, 1], [], []>} : vector<128x128xbf16>, vector<128x128xbf16>, vector<128x128xf32> -> vector<128x128xf32>
    %c0_18 = arith.constant 0 : index
    %c0_19 = arith.constant 0 : index
    %19 = vector.load %arg9[%c0_18, %c0_19] : memref<1x128xf32, #tpu.memory_space<vmem>>, vector<1x128xf32>
    %20 = vector.broadcast %19 : vector<1x128xf32> to vector<128x128xf32>
    %21 = arith.addf %18, %20 : vector<128x128xf32>
    %cst_20 = arith.constant 0.000000e+00 : f32
    %22 = vector.broadcast %cst_20 : f32 to vector<128x128xf32>
    %23 = arith.maximumf %21, %22 : vector<128x128xf32>
    %24 = arith.truncf %23 : vector<128x128xf32> to vector<128x128xbf16>
    %c0_21 = arith.constant 0 : index
    %c0_22 = arith.constant 0 : index
    %25 = vector.load %arg10[%c0_21, %c0_22] : memref<128x128xbf16, #tpu.memory_space<vmem>>, vector<128x128xbf16>
    %cst_23 = arith.constant dense<0.000000e+00> : vector<128x128xf32>
    %26 = tpu.matmul %24, %25, %cst_23 {dimension_numbers = #tpu.dot_dimension_numbers<[1], [0], [0], [1], [0, 0, 1, 1], [], []>} : vector<128x128xbf16>, vector<128x128xbf16>, vector<128x128xf32> -> vector<128x128xf32>
    %c0_24 = arith.constant 0 : index
    %c0_25 = arith.constant 0 : index
    %27 = vector.load %arg11[%c0_24, %c0_25] : memref<1x128xf32, #tpu.memory_space<vmem>>, vector<1x128xf32>
    %28 = vector.broadcast %27 : vector<1x128xf32> to vector<128x128xf32>
    %29 = arith.addf %26, %28 : vector<128x128xf32>
    %cst_26 = arith.constant dense<0.000000e+00> : vector<128xf32>
    %30 = vector.multi_reduction <add>, %29, %cst_26 [1] : vector<128x128xf32> to vector<128xf32>
    %31 = vector.shape_cast %30 : vector<128xf32> to vector<128x1xf32>
    %cst_27 = arith.constant 6.250000e-02 : f32
    %32 = vector.broadcast %cst_27 : f32 to vector<128x1xf32>
    %33 = arith.mulf %31, %32 : vector<128x1xf32>
    %34 = arith.mulf %29, %29 : vector<128x128xf32>
    %cst_28 = arith.constant dense<0.000000e+00> : vector<128xf32>
    %35 = vector.multi_reduction <add>, %34, %cst_28 [1] : vector<128x128xf32> to vector<128xf32>
    %36 = vector.shape_cast %35 : vector<128xf32> to vector<128x1xf32>
    %cst_29 = arith.constant 6.250000e-02 : f32
    %37 = vector.broadcast %cst_29 : f32 to vector<128x1xf32>
    %38 = arith.mulf %36, %37 : vector<128x1xf32>
    %39 = arith.mulf %33, %33 : vector<128x1xf32>
    %40 = arith.subf %38, %39 : vector<128x1xf32>
    %41 = vector.broadcast %33 : vector<128x1xf32> to vector<128x128xf32>
    %42 = arith.subf %29, %41 : vector<128x128xf32>
    %cst_30 = arith.constant 1.600000e+01 : f32
    %43 = vector.broadcast %cst_30 : f32 to vector<128x1xf32>
    %44 = arith.addf %40, %43 : vector<128x1xf32>
    %45 = math.rsqrt %44 : vector<128x1xf32>
    %46 = vector.broadcast %45 : vector<128x1xf32> to vector<128x128xf32>
    %47 = arith.mulf %42, %46 : vector<128x128xf32>
    %c0_31 = arith.constant 0 : index
    %c0_32 = arith.constant 0 : index
    %48 = vector.load %arg12[%c0_31, %c0_32] : memref<1x128xf32, #tpu.memory_space<vmem>>, vector<1x128xf32>
    %49 = vector.broadcast %48 : vector<1x128xf32> to vector<128x128xf32>
    %50 = arith.mulf %47, %49 : vector<128x128xf32>
    %c0_33 = arith.constant 0 : index
    %c0_34 = arith.constant 0 : index
    %51 = vector.load %arg13[%c0_33, %c0_34] : memref<1x128xf32, #tpu.memory_space<vmem>>, vector<1x128xf32>
    %52 = vector.broadcast %51 : vector<1x128xf32> to vector<128x128xf32>
    %53 = arith.addf %50, %52 : vector<128x128xf32>
    %c0_35 = arith.constant 0 : index
    %c0_36 = arith.constant 0 : index
    %c0_37 = arith.constant 0 : index
    %54 = vector.load %arg3[%c0_35, %c0_36, %c0_37] : memref<1x128x128xbf16, #tpu.memory_space<vmem>>, vector<1x128x128xbf16>
    %55 = vector.shape_cast %54 : vector<1x128x128xbf16> to vector<128x128xbf16>
    %c0_38 = arith.constant 0 : index
    %c0_39 = arith.constant 0 : index
    %56 = vector.load %arg14[%c0_38, %c0_39] : memref<128x128xbf16, #tpu.memory_space<vmem>>, vector<128x128xbf16>
    %cst_40 = arith.constant dense<0.000000e+00> : vector<128x128xf32>
    %57 = tpu.matmul %55, %56, %cst_40 {dimension_numbers = #tpu.dot_dimension_numbers<[1], [0], [0], [1], [0, 0, 1, 1], [], []>} : vector<128x128xbf16>, vector<128x128xbf16>, vector<128x128xf32> -> vector<128x128xf32>
    %c0_41 = arith.constant 0 : index
    %c0_42 = arith.constant 0 : index
    %58 = vector.load %arg15[%c0_41, %c0_42] : memref<1x128xf32, #tpu.memory_space<vmem>>, vector<1x128xf32>
    %59 = vector.broadcast %58 : vector<1x128xf32> to vector<128x128xf32>
    %60 = arith.addf %57, %59 : vector<128x128xf32>
    %cst_43 = arith.constant 0.000000e+00 : f32
    %61 = vector.broadcast %cst_43 : f32 to vector<128x128xf32>
    %62 = arith.maximumf %60, %61 : vector<128x128xf32>
    %63 = arith.truncf %62 : vector<128x128xf32> to vector<128x128xbf16>
    %c0_44 = arith.constant 0 : index
    %c0_45 = arith.constant 0 : index
    %64 = vector.load %arg16[%c0_44, %c0_45] : memref<128x128xbf16, #tpu.memory_space<vmem>>, vector<128x128xbf16>
    %cst_46 = arith.constant dense<0.000000e+00> : vector<128x128xf32>
    %65 = tpu.matmul %63, %64, %cst_46 {dimension_numbers = #tpu.dot_dimension_numbers<[1], [0], [0], [1], [0, 0, 1, 1], [], []>} : vector<128x128xbf16>, vector<128x128xbf16>, vector<128x128xf32> -> vector<128x128xf32>
    %c0_47 = arith.constant 0 : index
    %c0_48 = arith.constant 0 : index
    %66 = vector.load %arg17[%c0_47, %c0_48] : memref<1x128xf32, #tpu.memory_space<vmem>>, vector<1x128xf32>
    %67 = vector.broadcast %66 : vector<1x128xf32> to vector<128x128xf32>
    %68 = arith.addf %65, %67 : vector<128x128xf32>
    %69 = arith.truncf %14 : vector<8x128xf32> to vector<8x128xbf16>
    %70 = vector.shape_cast %69 : vector<8x128xbf16> to vector<1x8x128xbf16>
    %71 = arith.truncf %53 : vector<128x128xf32> to vector<128x128xbf16>
    %72 = vector.shape_cast %71 : vector<128x128xbf16> to vector<1x128x128xbf16>
    %73 = arith.truncf %68 : vector<128x128xf32> to vector<128x128xbf16>
    %74 = vector.shape_cast %73 : vector<128x128xbf16> to vector<1x128x128xbf16>
    "tpu.trace_start"() <{level = 10 : i32, message = "bmd,bde->bme"}> : () -> ()
    %cst_49 = arith.constant dense<0.000000e+00> : vector<1x8x128xf32>
    %75 = tpu.matmul %70, %72, %cst_49 {dimension_numbers = #tpu.dot_dimension_numbers<[2], [1], [1], [2], [0, 0, 0, 1, 1, 2], [0], [0]>} : vector<1x8x128xbf16>, vector<1x128x128xbf16>, vector<1x8x128xf32> -> vector<1x8x128xf32>
    "tpu.trace_stop"() : () -> ()
    %76 = arith.truncf %75 : vector<1x8x128xf32> to vector<1x8x128xbf16>
    "tpu.trace_start"() <{level = 10 : i32, message = "bme,ben->bmn"}> : () -> ()
    %cst_50 = arith.constant dense<0.000000e+00> : vector<1x8x128xf32>
    %77 = tpu.matmul %76, %74, %cst_50 {dimension_numbers = #tpu.dot_dimension_numbers<[2], [1], [1], [2], [0, 0, 0, 1, 1, 2], [0], [0]>} : vector<1x8x128xbf16>, vector<1x128x128xbf16>, vector<1x8x128xf32> -> vector<1x8x128xf32>
    "tpu.trace_stop"() : () -> ()
    %c0_51 = arith.constant 0 : index
    %c0_52 = arith.constant 0 : index
    %c0_53 = arith.constant 0 : index
    %78 = vector.load %arg18[%c0_51, %c0_52, %c0_53] : memref<1x8x128xf32, #tpu.memory_space<vmem>>, vector<1x8x128xf32>
    tpu.vector_store %arg18[%c0_51, %c0_52, %c0_53], %77 {strides = array<i32>} : memref<1x8x128xf32, #tpu.memory_space<vmem>>, vector<1x8x128xf32>,
    return
  }
  func.func @transform_0(%arg0: i32) -> (i32, i32, i32) {
    %c0_i32 = arith.constant 0 : i32
    %c0_i32_0 = arith.constant 0 : i32
    %c0_i32_1 = arith.constant 0 : i32
    return %arg0, %c0_i32, %c0_i32_0 : i32, i32, i32
  }
  func.func @transform_1(%arg0: i32) -> (i32, i32, i32) {
    %c0_i32 = arith.constant 0 : i32
    %c0_i32_0 = arith.constant 0 : i32
    %c0_i32_1 = arith.constant 0 : i32
    return %arg0, %c0_i32, %c0_i32_0 : i32, i32, i32
  }
  func.func @transform_2(%arg0: i32) -> (i32, i32, i32) {
    %c0_i32 = arith.constant 0 : i32
    %c0_i32_0 = arith.constant 0 : i32
    %c0_i32_1 = arith.constant 0 : i32
    return %arg0, %c0_i32, %c0_i32_0 : i32, i32, i32
  }
  func.func @transform_3(%arg0: i32) -> (i32, i32) {
    %c0_i32 = arith.constant 0 : i32
    %c0_i32_0 = arith.constant 0 : i32
    %c0_i32_1 = arith.constant 0 : i32
    return %c0_i32, %c0_i32_0 : i32, i32
  }
  func.func @transform_4(%arg0: i32) -> (i32, i32) {
    %c0_i32 = arith.constant 0 : i32
    %c0_i32_0 = arith.constant 0 : i32
    %c0_i32_1 = arith.constant 0 : i32
    return %c0_i32, %c0_i32_0 : i32, i32
  }
  func.func @transform_5(%arg0: i32) -> (i32, i32) {
    %c0_i32 = arith.constant 0 : i32
    %c0_i32_0 = arith.constant 0 : i32
    %c0_i32_1 = arith.constant 0 : i32
    return %c0_i32, %c0_i32_0 : i32, i32
  }
  func.func @transform_6(%arg0: i32) -> (i32, i32) {
    %c0_i32 = arith.constant 0 : i32
    %c0_i32_0 = arith.constant 0 : i32
    %c0_i32_1 = arith.constant 0 : i32
    return %c0_i32, %c0_i32_0 : i32, i32
  }
  func.func @transform_7(%arg0: i32) -> (i32, i32) {
    %c0_i32 = arith.constant 0 : i32
    %c0_i32_0 = arith.constant 0 : i32
    %c0_i32_1 = arith.constant 0 : i32
    return %c0_i32, %c0_i32_0 : i32, i32
  }
  func.func @transform_8(%arg0: i32) -> (i32, i32) {
    %c0_i32 = arith.constant 0 : i32
    %c0_i32_0 = arith.constant 0 : i32
    %c0_i32_1 = arith.constant 0 : i32
    return %c0_i32, %c0_i32_0 : i32, i32
  }
  func.func @transform_9(%arg0: i32) -> (i32, i32) {
    %c0_i32 = arith.constant 0 : i32
    %c0_i32_0 = arith.constant 0 : i32
    %c0_i32_1 = arith.constant 0 : i32
    return %c0_i32, %c0_i32_0 : i32, i32
  }
  func.func @transform_10(%arg0: i32) -> (i32, i32) {
    %c0_i32 = arith.constant 0 : i32
    %c0_i32_0 = arith.constant 0 : i32
    %c0_i32_1 = arith.constant 0 : i32
    return %c0_i32, %c0_i32_0 : i32, i32
  }
  func.func @transform_11(%arg0: i32) -> (i32, i32) {
    %c0_i32 = arith.constant 0 : i32
    %c0_i32_0 = arith.constant 0 : i32
    %c0_i32_1 = arith.constant 0 : i32
    return %c0_i32, %c0_i32_0 : i32, i32
  }
  func.func @transform_12(%arg0: i32) -> (i32, i32) {
    %c0_i32 = arith.constant 0 : i32
    %c0_i32_0 = arith.constant 0 : i32
    %c0_i32_1 = arith.constant 0 : i32
    return %c0_i32, %c0_i32_0 : i32, i32
  }
  func.func @transform_13(%arg0: i32) -> (i32, i32) {
    %c0_i32 = arith.constant 0 : i32
    %c0_i32_0 = arith.constant 0 : i32
    %c0_i32_1 = arith.constant 0 : i32
    return %c0_i32, %c0_i32_0 : i32, i32
  }
  func.func @transform_14(%arg0: i32) -> (i32, i32) {
    %c0_i32 = arith.constant 0 : i32
    %c0_i32_0 = arith.constant 0 : i32
    %c0_i32_1 = arith.constant 0 : i32
    return %c0_i32, %c0_i32_0 : i32, i32
  }
  func.func @transform_15(%arg0: i32) -> (i32, i32) {
    %c0_i32 = arith.constant 0 : i32
    %c0_i32_0 = arith.constant 0 : i32
    %c0_i32_1 = arith.constant 0 : i32
    return %c0_i32, %c0_i32_0 : i32, i32
  }
  func.func @transform_16(%arg0: i32) -> (i32, i32) {
    %c0_i32 = arith.constant 0 : i32
    %c0_i32_0 = arith.constant 0 : i32
    %c0_i32_1 = arith.constant 0 : i32
    return %c0_i32, %c0_i32_0 : i32, i32
  }
  func.func @transform_17(%arg0: i32) -> (i32, i32, i32) {
    %c0_i32 = arith.constant 0 : i32
    %c0_i32_0 = arith.constant 0 : i32
    %c0_i32_1 = arith.constant 0 : i32
    return %arg0, %c0_i32, %c0_i32_0 : i32, i32, i32
  }
}

</mosaic_0001>

<llo_original>
// kernel: tpu_custom_call.1
$region0: #{tpu_custom_call.1}
  #allocation0 [shape = 'u32[]', space=smem, size = 0x4, offset = 0x4, fixed_abs, tag = 'smem constant byte address 0x4 - core index']
  #allocation1 [shape = 'u32[72,128]{1,0:T(1,128)}', space=vmem, size = 0x9000, scoped, tag = 'internal scratch']
  %s0 = inlined_call_operand.hbm [shape: bf16[2,8,128], index: 0, kind: input, shape index: {}]
  %s1 = inlined_call_operand.hbm [shape: bf16[2,128,128], index: 1, kind: input, shape index: {}]
  %s2 = inlined_call_operand.hbm [shape: bf16[2,128,128], index: 2, kind: input, shape index: {}]
  %s3 = inlined_call_operand.hbm [shape: bf16[128,128], index: 3, kind: input, shape index: {}]
  %s4 = inlined_call_operand.vmem [shape: f32[1,128], index: 4, kind: input, shape index: {}]
  %s5 = inlined_call_operand.hbm [shape: bf16[128,128], index: 5, kind: input, shape index: {}]
  %s6 = inlined_call_operand.vmem [shape: f32[1,128], index: 6, kind: input, shape index: {}]
  %s7 = inlined_call_operand.hbm [shape: bf16[128,128], index: 7, kind: input, shape index: {}]
  %s8 = inlined_call_operand.vmem [shape: f32[1,128], index: 8, kind: input, shape index: {}]
  %s9 = inlined_call_operand.hbm [shape: bf16[128,128], index: 9, kind: input, shape index: {}]
  %s10 = inlined_call_operand.vmem [shape: f32[1,128], index: 10, kind: input, shape index: {}]
  %s11 = inlined_call_operand.vmem [shape: f32[1,128], index: 11, kind: input, shape index: {}]
  %s12 = inlined_call_operand.vmem [shape: f32[1,128], index: 12, kind: input, shape index: {}]
  %s13 = inlined_call_operand.hbm [shape: bf16[128,128], index: 13, kind: input, shape index: {}]
  %s14 = inlined_call_operand.vmem [shape: f32[1,128], index: 14, kind: input, shape index: {}]
  %s15 = inlined_call_operand.hbm [shape: bf16[128,128], index: 15, kind: input, shape index: {}]
  %s16 = inlined_call_operand.vmem [shape: f32[1,128], index: 16, kind: input, shape index: {}]
  %s17 = inlined_call_operand.hbm [shape: f32[2,8,128], index: 17, kind: output, shape index: {}]
  %s18 = sld [smem:[#allocation0]]
  $region137: #{tpu_custom_call.1} parent=0
    _
  %s20 = ssub.s32 1, %s18
  %s21 = scalar_select 0, %s20, %s18
  $region1: #{tpu_custom_call.1} parent=0
    #allocation2 [shape = 'u8[4096]{0}', space=vmem, size = 0x1000, scoped, tag = 'input window, operand 0']
    #allocation3 [shape = 's32[2]{0}', space=sflag, size = 0x8, scoped, tag = 'scoped memory for tpu_custom_call.1']
    #allocation4 [shape = 's32[2]{0}', space=sflag, size = 0x8, scoped, tag = 'scoped memory for tpu_custom_call.1']
    #allocation5 [shape = 'u8[65536]{0}', space=vmem, size = 0x10000, scoped, tag = 'input window, operand 1']
    #allocation6 [shape = 's32[2]{0}', space=sflag, size = 0x8, scoped, tag = 'scoped memory for tpu_custom_call.1']
    #allocation7 [shape = 'u8[65536]{0}', space=vmem, size = 0x10000, scoped, tag = 'input window, operand 2']
    #allocation8 [shape = 'u8[32768]{0}', space=vmem, size = 0x8000, scoped, tag = 'input window, operand 3, single buffered']
    #allocation9 [shape = 's32[1]{0}', space=sflag, size = 0x4, scoped, tag = 'scoped memory for tpu_custom_call.1']
    #allocation10 [shape = 'u8[32768]{0}', space=vmem, size = 0x8000, scoped, tag = 'input window, operand 5, single buffered']
    #allocation11 [shape = 'u8[32768]{0}', space=vmem, size = 0x8000, scoped, tag = 'input window, operand 7, single buffered']
    #allocation12 [shape = 's32[1]{0}', space=sflag, size = 0x4, scoped, tag = 'scoped memory for tpu_custom_call.1']
    #allocation13 [shape = 'u8[32768]{0}', space=vmem, size = 0x8000, scoped, tag = 'input window, operand 9, single buffered']
    #allocation14 [shape = 'u8[32768]{0}', space=vmem, size = 0x8000, scoped, tag = 'input window, operand 13, single buffered']
    #allocation15 [shape = 's32[1]{0}', space=sflag, size = 0x4, scoped, tag = 'scoped memory for tpu_custom_call.1']
    #allocation16 [shape = 'u8[32768]{0}', space=vmem, size = 0x8000, scoped, tag = 'input window, operand 15, single buffered']
    #allocation17 [shape = 'u8[8192]{0}', space=vmem, size = 0x2000, scoped, tag = 'output window, operand 0']
    %22 = vsyncpa [#allocation3], 0
    %s23 = scalar_lea.sflag [#allocation3], 1
    %24 = vsyncpa %s23, 0
    %25 = vsyncpa [#allocation6], 0
    %s26 = scalar_lea.sflag [#allocation6], 1
    %27 = vsyncpa %s26, 0
    %28 = vsyncpa [#allocation9], 0
    %29 = vsyncpa [#allocation12], 0
    %30 = vsyncpa [#allocation15], 0
    %31 = vsyncpa [#allocation4], 0
    %s32 = scalar_lea.sflag [#allocation4], 1
    %33 = vsyncpa %s32, 0
    loop: start=0, step=1, limit=4
    $region2: #{tpu_custom_call.1} parent=1 // loop_pre_header
      _
    $region3: #{tpu_custom_call.1} parent=1 // loop_header
      %s35 = sphi 0, %s39
      %p36 = scmp.ge.s32.totalorder %s35, 4
      %s45 = sphi 0, %s47
      %s48 = sphi 0, %s45
      %s49 = sphi 0, %s48
      %s65 = sphi 0, %s49
      %s71 = sphi 0, %s73
      %s74 = sphi 0, %s71
      %s75 = sphi 0, %s74
      %s91 = sphi 0, %s75
      %s97 = sphi 0, %s99
      %s100 = sphi 0, %s97
      %s101 = sphi 0, %s100
      %s117 = sphi 0, %s101
      %s121 = sphi 0, %s121
      %s123 = sphi 0, %s121
      %s124 = sphi 0, %s123
      %s138 = sphi 0, %s124
      %s142 = sphi 0, %s142
      %s144 = sphi 0, %s142
      %s145 = sphi 0, %s144
      %s159 = sphi 0, %s145
      %s163 = sphi 0, %s163
      %s165 = sphi 0, %s163
      %s166 = sphi 0, %s165
      %s180 = sphi 0, %s166
      %s184 = sphi 0, %s184
      %s186 = sphi 0, %s184
      %s187 = sphi 0, %s186
      %s201 = sphi 0, %s187
      %s205 = sphi 0, %s205
      %s207 = sphi 0, %s205
      %s208 = sphi 0, %s207
      %s222 = sphi 0, %s208
      %s226 = sphi 0, %s226
      %s228 = sphi 0, %s226
      %s229 = sphi 0, %s228
      %s243 = sphi 0, %s229
      %s247 = sphi 0, %s247
      %s249 = sphi 0, %s247
      %s250 = sphi 0, %s249
      %s264 = sphi 0, %s250
      %s268 = sphi 0, %s268
      %s270 = sphi 0, %s268
      %s271 = sphi 0, %s270
      %s285 = sphi 0, %s271
      %s289 = sphi 0, %s289
      %s291 = sphi 0, %s289
      %s292 = sphi 0, %s291
      %s306 = sphi 0, %s292
      %s310 = sphi 0, %s310
      %s312 = sphi 0, %s310
      %s313 = sphi 0, %s312
      %s327 = sphi 0, %s313
      %s331 = sphi 0, %s331
      %s333 = sphi 0, %s331
      %s334 = sphi 0, %s333
      %s348 = sphi 0, %s334
      %s352 = sphi 0, %s352
      %s354 = sphi 0, %s352
      %s355 = sphi 0, %s354
      %s369 = sphi 0, %s355
      %s373 = sphi 0, %s373
      %s375 = sphi 0, %s373
      %s376 = sphi 0, %s375
      %s390 = sphi 0, %s376
      %s394 = sphi 0, %s394
      %s396 = sphi 0, %s394
      %s397 = sphi 0, %s396
      %s411 = sphi 0, %s397
      %s417 = sphi 0, %s419
      %s420 = sphi 0, %s417
      %s421 = sphi 0, %s420
      %s437 = sphi 0, %s421
    $region4: #{tpu_custom_call.1} parent=1 // loop_header_branch
      %38 = sbr.rel (%p36) target = $region8
    $region5: #{tpu_custom_call.1} parent=1 // loop_body
      %s40 = ssub.s32 %s35, 1
      %s41 = ssub.s32 %s35, 2
      %s42 = sadd.s32 %s35, 1
      %s43 = ssub.s32 %s35, %s42
      %p44 = scmp.eq.s32.totalorder %s43, 0
      %s46 = sadd.s32 %s45, 1
      %s47 = scalar_select %p44, %s45, %s46
      %p50 = pneg %p44
      %p51 = scmp.eq.s32.totalorder %s35, 1
      %p52 = por %p50, %p51
      %p53 = scmp.ne.s32.totalorder %s45, %s48
      %p54 = scmp.eq.s32.totalorder %s35, 0
      %p55 = por %p53, %p54
      %p56 = scmp.ne.s32.totalorder %s45, %s48
      %p57 = scmp.eq.s32.totalorder %s40, 1
      %p58 = por %p56, %p57
      %p59 = scmp.ne.s32.totalorder %s48, %s49
      %p60 = scmp.eq.s32.totalorder %s40, 0
      %p61 = por %p59, %p60
      %p62 = scmp.ne.s32.totalorder %s48, %s49
      %p63 = scmp.eq.s32.totalorder %s41, 1
      %p64 = por %p62, %p63
      %p66 = scmp.ne.s32.totalorder %s49, %s65
      %p67 = scmp.eq.s32.totalorder %s41, 0
      %p68 = por %p66, %p67
      %s69 = ssub.s32 %s35, %s42
      %p70 = scmp.eq.s32.totalorder %s69, 0
      %s72 = sadd.s32 %s71, 1
      %s73 = scalar_select %p70, %s71, %s72
      %p76 = pneg %p70
      %p77 = scmp.eq.s32.totalorder %s35, 1
      %p78 = por %p76, %p77
      %p79 = scmp.ne.s32.totalorder %s71, %s74
      %p80 = scmp.eq.s32.totalorder %s35, 0
      %p81 = por %p79, %p80
      %p82 = scmp.ne.s32.totalorder %s71, %s74
      %p83 = scmp.eq.s32.totalorder %s40, 1
      %p84 = por %p82, %p83
      %p85 = scmp.ne.s32.totalorder %s74, %s75
      %p86 = scmp.eq.s32.totalorder %s40, 0
      %p87 = por %p85, %p86
      %p88 = scmp.ne.s32.totalorder %s74, %s75
      %p89 = scmp.eq.s32.totalorder %s41, 1
      %p90 = por %p88, %p89
      %p92 = scmp.ne.s32.totalorder %s75, %s91
      %p93 = scmp.eq.s32.totalorder %s41, 0
      %p94 = por %p92, %p93
      %s95 = ssub.s32 %s35, %s42
      %p96 = scmp.eq.s32.totalorder %s95, 0
      %s98 = sadd.s32 %s97, 1
      %s99 = scalar_select %p96, %s97, %s98
      %p102 = pneg %p96
      %p103 = scmp.eq.s32.totalorder %s35, 1
      %p104 = por %p102, %p103
      %p105 = scmp.ne.s32.totalorder %s97, %s100
      %p106 = scmp.eq.s32.totalorder %s35, 0
      %p107 = por %p105, %p106
      %p108 = scmp.ne.s32.totalorder %s97, %s100
      %p109 = scmp.eq.s32.totalorder %s40, 1
      %p110 = por %p108, %p109
      %p111 = scmp.ne.s32.totalorder %s100, %s101
      %p112 = scmp.eq.s32.totalorder %s40, 0
      %p113 = por %p111, %p112
      %p114 = scmp.ne.s32.totalorder %s100, %s101
      %p115 = scmp.eq.s32.totalorder %s41, 1
      %p116 = por %p114, %p115
      %p118 = scmp.ne.s32.totalorder %s101, %s117
      %p119 = scmp.eq.s32.totalorder %s41, 0
      %p120 = por %p118, %p119
      %s122 = sadd.s32 %s121, 1
      %p125 = scmp.eq.s32.totalorder %s35, 1
      %p126 = scmp.ne.s32.totalorder %s121, %s123
      %p127 = scmp.eq.s32.totalorder %s35, 0
      %p128 = por %p126, %p127
      %p129 = scmp.ne.s32.totalorder %s121, %s123
      %p130 = scmp.eq.s32.totalorder %s40, 1
      %p131 = por %p129, %p130
      %p132 = scmp.ne.s32.totalorder %s123, %s124
      %p133 = scmp.eq.s32.totalorder %s40, 0
      %p134 = por %p132, %p133
      %p135 = scmp.ne.s32.totalorder %s123, %s124
      %p136 = scmp.eq.s32.totalorder %s41, 1
      %p137 = por %p135, %p136
      %p139 = scmp.ne.s32.totalorder %s124, %s138
      %p140 = scmp.eq.s32.totalorder %s41, 0
      %p141 = por %p139, %p140
      %s143 = sadd.s32 %s142, 1
      %p146 = scmp.eq.s32.totalorder %s35, 1
      %p147 = scmp.ne.s32.totalorder %s142, %s144
      %p148 = scmp.eq.s32.totalorder %s35, 0
      %p149 = por %p147, %p148
      %p150 = scmp.ne.s32.totalorder %s142, %s144
      %p151 = scmp.eq.s32.totalorder %s40, 1
      %p152 = por %p150, %p151
      %p153 = scmp.ne.s32.totalorder %s144, %s145
      %p154 = scmp.eq.s32.totalorder %s40, 0
      %p155 = por %p153, %p154
      %p156 = scmp.ne.s32.totalorder %s144, %s145
      %p157 = scmp.eq.s32.totalorder %s41, 1
      %p158 = por %p156, %p157
      %p160 = scmp.ne.s32.totalorder %s145, %s159
      %p161 = scmp.eq.s32.totalorder %s41, 0
      %p162 = por %p160, %p161
      %s164 = sadd.s32 %s163, 1
      %p167 = scmp.eq.s32.totalorder %s35, 1
      %p168 = scmp.ne.s32.totalorder %s163, %s165
      %p169 = scmp.eq.s32.totalorder %s35, 0
      %p170 = por %p168, %p169
      %p171 = scmp.ne.s32.totalorder %s163, %s165
      %p172 = scmp.eq.s32.totalorder %s40, 1
      %p173 = por %p171, %p172
      %p174 = scmp.ne.s32.totalorder %s165, %s166
      %p175 = scmp.eq.s32.totalorder %s40, 0
      %p176 = por %p174, %p175
      %p177 = scmp.ne.s32.totalorder %s165, %s166
      %p178 = scmp.eq.s32.totalorder %s41, 1
      %p179 = por %p177, %p178
      %p181 = scmp.ne.s32.totalorder %s166, %s180
      %p182 = scmp.eq.s32.totalorder %s41, 0
      %p183 = por %p181, %p182
      %s185 = sadd.s32 %s184, 1
      %p188 = scmp.eq.s32.totalorder %s35, 1
      %p189 = scmp.ne.s32.totalorder %s184, %s186
      %p190 = scmp.eq.s32.totalorder %s35, 0
      %p191 = por %p189, %p190
      %p192 = scmp.ne.s32.totalorder %s184, %s186
      %p193 = scmp.eq.s32.totalorder %s40, 1
      %p194 = por %p192, %p193
      %p195 = scmp.ne.s32.totalorder %s186, %s187
      %p196 = scmp.eq.s32.totalorder %s40, 0
      %p197 = por %p195, %p196
      %p198 = scmp.ne.s32.totalorder %s186, %s187
      %p199 = scmp.eq.s32.totalorder %s41, 1
      %p200 = por %p198, %p199
      %p202 = scmp.ne.s32.totalorder %s187, %s201
      %p203 = scmp.eq.s32.totalorder %s41, 0
      %p204 = por %p202, %p203
      %s206 = sadd.s32 %s205, 1
      %p209 = scmp.eq.s32.totalorder %s35, 1
      %p210 = scmp.ne.s32.totalorder %s205, %s207
      %p211 = scmp.eq.s32.totalorder %s35, 0
      %p212 = por %p210, %p211
      %p213 = scmp.ne.s32.totalorder %s205, %s207
      %p214 = scmp.eq.s32.totalorder %s40, 1
      %p215 = por %p213, %p214
      %p216 = scmp.ne.s32.totalorder %s207, %s208
      %p217 = scmp.eq.s32.totalorder %s40, 0
      %p218 = por %p216, %p217
      %p219 = scmp.ne.s32.totalorder %s207, %s208
      %p220 = scmp.eq.s32.totalorder %s41, 1
      %p221 = por %p219, %p220
      %p223 = scmp.ne.s32.totalorder %s208, %s222
      %p224 = scmp.eq.s32.totalorder %s41, 0
      %p225 = por %p223, %p224
      %s227 = sadd.s32 %s226, 1
      %p230 = scmp.eq.s32.totalorder %s35, 1
      %p231 = scmp.ne.s32.totalorder %s226, %s228
      %p232 = scmp.eq.s32.totalorder %s35, 0
      %p233 = por %p231, %p232
      %p234 = scmp.ne.s32.totalorder %s226, %s228
      %p235 = scmp.eq.s32.totalorder %s40, 1
      %p236 = por %p234, %p235
      %p237 = scmp.ne.s32.totalorder %s228, %s229
      %p238 = scmp.eq.s32.totalorder %s40, 0
      %p239 = por %p237, %p238
      %p240 = scmp.ne.s32.totalorder %s228, %s229
      %p241 = scmp.eq.s32.totalorder %s41, 1
      %p242 = por %p240, %p241
      %p244 = scmp.ne.s32.totalorder %s229, %s243
      %p245 = scmp.eq.s32.totalorder %s41, 0
      %p246 = por %p244, %p245
      %s248 = sadd.s32 %s247, 1
      %p251 = scmp.eq.s32.totalorder %s35, 1
      %p252 = scmp.ne.s32.totalorder %s247, %s249
      %p253 = scmp.eq.s32.totalorder %s35, 0
      %p254 = por %p252, %p253
      %p255 = scmp.ne.s32.totalorder %s247, %s249
      %p256 = scmp.eq.s32.totalorder %s40, 1
      %p257 = por %p255, %p256
      %p258 = scmp.ne.s32.totalorder %s249, %s250
      %p259 = scmp.eq.s32.totalorder %s40, 0
      %p260 = por %p258, %p259
      %p261 = scmp.ne.s32.totalorder %s249, %s250
      %p262 = scmp.eq.s32.totalorder %s41, 1
      %p263 = por %p261, %p262
      %p265 = scmp.ne.s32.totalorder %s250, %s264
      %p266 = scmp.eq.s32.totalorder %s41, 0
      %p267 = por %p265, %p266
      %s269 = sadd.s32 %s268, 1
      %p272 = scmp.eq.s32.totalorder %s35, 1
      %p273 = scmp.ne.s32.totalorder %s268, %s270
      %p274 = scmp.eq.s32.totalorder %s35, 0
      %p275 = por %p273, %p274
      %p276 = scmp.ne.s32.totalorder %s268, %s270
      %p277 = scmp.eq.s32.totalorder %s40, 1
      %p278 = por %p276, %p277
      %p279 = scmp.ne.s32.totalorder %s270, %s271
      %p280 = scmp.eq.s32.totalorder %s40, 0
      %p281 = por %p279, %p280
      %p282 = scmp.ne.s32.totalorder %s270, %s271
      %p283 = scmp.eq.s32.totalorder %s41, 1
      %p284 = por %p282, %p283
      %p286 = scmp.ne.s32.totalorder %s271, %s285
      %p287 = scmp.eq.s32.totalorder %s41, 0
      %p288 = por %p286, %p287
      %s290 = sadd.s32 %s289, 1
      %p293 = scmp.eq.s32.totalorder %s35, 1
      %p294 = scmp.ne.s32.totalorder %s289, %s291
      %p295 = scmp.eq.s32.totalorder %s35, 0
      %p296 = por %p294, %p295
      %p297 = scmp.ne.s32.totalorder %s289, %s291
      %p298 = scmp.eq.s32.totalorder %s40, 1
      %p299 = por %p297, %p298
      %p300 = scmp.ne.s32.totalorder %s291, %s292
      %p301 = scmp.eq.s32.totalorder %s40, 0
      %p302 = por %p300, %p301
      %p303 = scmp.ne.s32.totalorder %s291, %s292
      %p304 = scmp.eq.s32.totalorder %s41, 1
      %p305 = por %p303, %p304
      %p307 = scmp.ne.s32.totalorder %s292, %s306
      %p308 = scmp.eq.s32.totalorder %s41, 0
      %p309 = por %p307, %p308
      %s311 = sadd.s32 %s310, 1
      %p314 = scmp.eq.s32.totalorder %s35, 1
      %p315 = scmp.ne.s32.totalorder %s310, %s312
      %p316 = scmp.eq.s32.totalorder %s35, 0
      %p317 = por %p315, %p316
      %p318 = scmp.ne.s32.totalorder %s310, %s312
      %p319 = scmp.eq.s32.totalorder %s40, 1
      %p320 = por %p318, %p319
      %p321 = scmp.ne.s32.totalorder %s312, %s313
      %p322 = scmp.eq.s32.totalorder %s40, 0
      %p323 = por %p321, %p322
      %p324 = scmp.ne.s32.totalorder %s312, %s313
      %p325 = scmp.eq.s32.totalorder %s41, 1
      %p326 = por %p324, %p325
      %p328 = scmp.ne.s32.totalorder %s313, %s327
      %p329 = scmp.eq.s32.totalorder %s41, 0
      %p330 = por %p328, %p329
      %s332 = sadd.s32 %s331, 1
      %p335 = scmp.eq.s32.totalorder %s35, 1
      %p336 = scmp.ne.s32.totalorder %s331, %s333
      %p337 = scmp.eq.s32.totalorder %s35, 0
      %p338 = por %p336, %p337
      %p339 = scmp.ne.s32.totalorder %s331, %s333
      %p340 = scmp.eq.s32.totalorder %s40, 1
      %p341 = por %p339, %p340
      %p342 = scmp.ne.s32.totalorder %s333, %s334
      %p343 = scmp.eq.s32.totalorder %s40, 0
      %p344 = por %p342, %p343
      %p345 = scmp.ne.s32.totalorder %s333, %s334
      %p346 = scmp.eq.s32.totalorder %s41, 1
      %p347 = por %p345, %p346
      %p349 = scmp.ne.s32.totalorder %s334, %s348
      %p350 = scmp.eq.s32.totalorder %s41, 0
      %p351 = por %p349, %p350
      %s353 = sadd.s32 %s352, 1
      %p356 = scmp.eq.s32.totalorder %s35, 1
      %p357 = scmp.ne.s32.totalorder %s352, %s354
      %p358 = scmp.eq.s32.totalorder %s35, 0
      %p359 = por %p357, %p358
      %p360 = scmp.ne.s32.totalorder %s352, %s354
      %p361 = scmp.eq.s32.totalorder %s40, 1
      %p362 = por %p360, %p361
      %p363 = scmp.ne.s32.totalorder %s354, %s355
      %p364 = scmp.eq.s32.totalorder %s40, 0
      %p365 = por %p363, %p364
      %p366 = scmp.ne.s32.totalorder %s354, %s355
      %p367 = scmp.eq.s32.totalorder %s41, 1
      %p368 = por %p366, %p367
      %p370 = scmp.ne.s32.totalorder %s355, %s369
      %p371 = scmp.eq.s32.totalorder %s41, 0
      %p372 = por %p370, %p371
      %s374 = sadd.s32 %s373, 1
      %p377 = scmp.eq.s32.totalorder %s35, 1
      %p378 = scmp.ne.s32.totalorder %s373, %s375
      %p379 = scmp.eq.s32.totalorder %s35, 0
      %p380 = por %p378, %p379
      %p381 = scmp.ne.s32.totalorder %s373, %s375
      %p382 = scmp.eq.s32.totalorder %s40, 1
      %p383 = por %p381, %p382
      %p384 = scmp.ne.s32.totalorder %s375, %s376
      %p385 = scmp.eq.s32.totalorder %s40, 0
      %p386 = por %p384, %p385
      %p387 = scmp.ne.s32.totalorder %s375, %s376
      %p388 = scmp.eq.s32.totalorder %s41, 1
      %p389 = por %p387, %p388
      %p391 = scmp.ne.s32.totalorder %s376, %s390
      %p392 = scmp.eq.s32.totalorder %s41, 0
      %p393 = por %p391, %p392
      %s395 = sadd.s32 %s394, 1
      %p398 = scmp.eq.s32.totalorder %s35, 1
      %p399 = scmp.ne.s32.totalorder %s394, %s396
      %p400 = scmp.eq.s32.totalorder %s35, 0
      %p401 = por %p399, %p400
      %p402 = scmp.ne.s32.totalorder %s394, %s396
      %p403 = scmp.eq.s32.totalorder %s40, 1
      %p404 = por %p402, %p403
      %p405 = scmp.ne.s32.totalorder %s396, %s397
      %p406 = scmp.eq.s32.totalorder %s40, 0
      %p407 = por %p405, %p406
      %p408 = scmp.ne.s32.totalorder %s396, %s397
      %p409 = scmp.eq.s32.totalorder %s41, 1
      %p410 = por %p408, %p409
      %p412 = scmp.ne.s32.totalorder %s397, %s411
      %p413 = scmp.eq.s32.totalorder %s41, 0
      %p414 = por %p412, %p413
      %s415 = ssub.s32 %s35, %s42
      %p416 = scmp.eq.s32.totalorder %s415, 0
      %s418 = sadd.s32 %s417, 1
      %s419 = scalar_select %p416, %s417, %s418
      %p422 = pneg %p416
      %p423 = scmp.eq.s32.totalorder %s35, 1
      %p424 = por %p422, %p423
      %p425 = scmp.ne.s32.totalorder %s417, %s420
      %p426 = scmp.eq.s32.totalorder %s35, 0
      %p427 = por %p425, %p426
      %p428 = scmp.ne.s32.totalorder %s417, %s420
      %p429 = scmp.eq.s32.totalorder %s40, 1
      %p430 = por %p428, %p429
      %p431 = scmp.ne.s32.totalorder %s420, %s421
      %p432 = scmp.eq.s32.totalorder %s40, 0
      %p433 = por %p431, %p432
      %p434 = scmp.ne.s32.totalorder %s420, %s421
      %p435 = scmp.eq.s32.totalorder %s41, 1
      %p436 = por %p434, %p435
      %p438 = scmp.ne.s32.totalorder %s421, %s437
      %p439 = scmp.eq.s32.totalorder %s41, 0
      %p440 = por %p438, %p439
      %p441 = scmp.le.s32.totalorder 1, %s35
      %p442 = scmp.lt.s32.totalorder %s35, 3
      %p443 = pnand %p441, %p442
      %p444 = pneg %p443
      // Predicated region
      $region9: #{tpu_custom_call.1} parent=5 // pred_check
        _
      $region10: #{tpu_custom_call.1} parent=5 // pred_check_branch
        %446 = sbr.rel (%p443) target = $region12
      $region11: #{tpu_custom_call.1} parent=5 // pred_region
        %s447 = ssub.s32 %s35, 1
        // Predicated region
        $region13: #{tpu_custom_call.1} parent=11 // pred_check
          %p448 = pneg %p134
        $region14: #{tpu_custom_call.1} parent=11 // pred_check_branch
          %450 = sbr.rel (%p448) target = $region16
        $region15: #{tpu_custom_call.1} parent=11 // pred_region
          %452 = vsyncadd [#allocation9], 0
          %s453 = sshll.u32 %s3, 4
          %s454 = int_to_ptr.hbm [resolvable:$true] %s453
          %s455 = sshll.u32 [#allocation8], 4
          %s456 = int_to_ptr.vmem [resolvable:$true] %s455
          %461 = dma.hbm_to_vmem [thread:$0]  %s454, 1024, %s456, [#allocation9], 64, 64, 4
        $region16: #{tpu_custom_call.1} parent=11 // pred_fallthru
          _
        // Predicated region
        $region17: #{tpu_custom_call.1} parent=11 // pred_check
          %p462 = pneg %p155
        $region18: #{tpu_custom_call.1} parent=11 // pred_check_branch
          %464 = sbr.rel (%p462) target = $region20
        $region19: #{tpu_custom_call.1} parent=11 // pred_region
          _
        $region20: #{tpu_custom_call.1} parent=11 // pred_fallthru
          _
        // Predicated region
        $region21: #{tpu_custom_call.1} parent=11 // pred_check
          %p465 = pneg %p176
        $region22: #{tpu_custom_call.1} parent=11 // pred_check_branch
          %467 = sbr.rel (%p465) target = $region24
        $region23: #{tpu_custom_call.1} parent=11 // pred_region
          %469 = vsyncadd [#allocation9], 0
          %s470 = sshll.u32 %s5, 4
          %s471 = int_to_ptr.hbm [resolvable:$true] %s470
          %s472 = sshll.u32 [#allocation10], 4
          %s473 = int_to_ptr.vmem [resolvable:$true] %s472
          %478 = dma.hbm_to_vmem [thread:$0]  %s471, 1024, %s473, [#allocation9], 64, 64, 4
        $region24: #{tpu_custom_call.1} parent=11 // pred_fallthru
          _
        // Predicated region
        $region25: #{tpu_custom_call.1} parent=11 // pred_check
          %p479 = pneg %p197
        $region26: #{tpu_custom_call.1} parent=11 // pred_check_branch
          %481 = sbr.rel (%p479) target = $region28
        $region27: #{tpu_custom_call.1} parent=11 // pred_region
          _
        $region28: #{tpu_custom_call.1} parent=11 // pred_fallthru
          _
        // Predicated region
        $region29: #{tpu_custom_call.1} parent=11 // pred_check
          %p482 = pneg %p218
        $region30: #{tpu_custom_call.1} parent=11 // pred_check_branch
          %484 = sbr.rel (%p482) target = $region32
        $region31: #{tpu_custom_call.1} parent=11 // pred_region
          %486 = vsyncadd [#allocation12], 0
          %s487 = sshll.u32 %s7, 4
          %s488 = int_to_ptr.hbm [resolvable:$true] %s487
          %s489 = sshll.u32 [#allocation11], 4
          %s490 = int_to_ptr.vmem [resolvable:$true] %s489
          %495 = dma.hbm_to_vmem [thread:$0]  %s488, 1024, %s490, [#allocation12], 64, 64, 4
        $region32: #{tpu_custom_call.1} parent=11 // pred_fallthru
          _
        // Predicated region
        $region33: #{tpu_custom_call.1} parent=11 // pred_check
          %p496 = pneg %p239
        $region34: #{tpu_custom_call.1} parent=11 // pred_check_branch
          %498 = sbr.rel (%p496) target = $region36
        $region35: #{tpu_custom_call.1} parent=11 // pred_region
          _
        $region36: #{tpu_custom_call.1} parent=11 // pred_fallthru
          _
        // Predicated region
        $region37: #{tpu_custom_call.1} parent=11 // pred_check
          %p499 = pneg %p260
        $region38: #{tpu_custom_call.1} parent=11 // pred_check_branch
          %501 = sbr.rel (%p499) target = $region40
        $region39: #{tpu_custom_call.1} parent=11 // pred_region
          %503 = vsyncadd [#allocation12], 0
          %s504 = sshll.u32 %s9, 4
          %s505 = int_to_ptr.hbm [resolvable:$true] %s504
          %s506 = sshll.u32 [#allocation13], 4
          %s507 = int_to_ptr.vmem [resolvable:$true] %s506
          %512 = dma.hbm_to_vmem [thread:$0]  %s505, 1024, %s507, [#allocation12], 64, 64, 4
        $region40: #{tpu_custom_call.1} parent=11 // pred_fallthru
          _
        // Predicated region
        $region41: #{tpu_custom_call.1} parent=11 // pred_check
          %p513 = pneg %p281
        $region42: #{tpu_custom_call.1} parent=11 // pred_check_branch
          %515 = sbr.rel (%p513) target = $region44
        $region43: #{tpu_custom_call.1} parent=11 // pred_region
          _
        $region44: #{tpu_custom_call.1} parent=11 // pred_fallthru
          _
        // Predicated region
        $region45: #{tpu_custom_call.1} parent=11 // pred_check
          %p516 = pneg %p302
        $region46: #{tpu_custom_call.1} parent=11 // pred_check_branch
          %518 = sbr.rel (%p516) target = $region48
        $region47: #{tpu_custom_call.1} parent=11 // pred_region
          _
        $region48: #{tpu_custom_call.1} parent=11 // pred_fallthru
          _
        // Predicated region
        $region49: #{tpu_custom_call.1} parent=11 // pred_check
          %p519 = pneg %p323
        $region50: #{tpu_custom_call.1} parent=11 // pred_check_branch
          %521 = sbr.rel (%p519) target = $region52
        $region51: #{tpu_custom_call.1} parent=11 // pred_region
          _
        $region52: #{tpu_custom_call.1} parent=11 // pred_fallthru
          _
        // Predicated region
        $region53: #{tpu_custom_call.1} parent=11 // pred_check
          %p522 = pneg %p344
        $region54: #{tpu_custom_call.1} parent=11 // pred_check_branch
          %524 = sbr.rel (%p522) target = $region56
        $region55: #{tpu_custom_call.1} parent=11 // pred_region
          %526 = vsyncadd [#allocation15], 0
          %s527 = sshll.u32 %s13, 4
          %s528 = int_to_ptr.hbm [resolvable:$true] %s527
          %s529 = sshll.u32 [#allocation14], 4
          %s530 = int_to_ptr.vmem [resolvable:$true] %s529
          %535 = dma.hbm_to_vmem [thread:$0]  %s528, 1024, %s530, [#allocation15], 64, 64, 4
        $region56: #{tpu_custom_call.1} parent=11 // pred_fallthru
          _
        // Predicated region
        $region57: #{tpu_custom_call.1} parent=11 // pred_check
          %p536 = pneg %p365
        $region58: #{tpu_custom_call.1} parent=11 // pred_check_branch
          %538 = sbr.rel (%p536) target = $region60
        $region59: #{tpu_custom_call.1} parent=11 // pred_region
          _
        $region60: #{tpu_custom_call.1} parent=11 // pred_fallthru
          _
        // Predicated region
        $region61: #{tpu_custom_call.1} parent=11 // pred_check
          %p539 = pneg %p386
        $region62: #{tpu_custom_call.1} parent=11 // pred_check_branch
          %541 = sbr.rel (%p539) target = $region64
        $region63: #{tpu_custom_call.1} parent=11 // pred_region
          %543 = vsyncadd [#allocation15], 0
          %s544 = sshll.u32 %s15, 4
          %s545 = int_to_ptr.hbm [resolvable:$true] %s544
          %s546 = sshll.u32 [#allocation16], 4
          %s547 = int_to_ptr.vmem [resolvable:$true] %s546
          %552 = dma.hbm_to_vmem [thread:$0]  %s545, 1024, %s547, [#allocation15], 64, 64, 4
        $region64: #{tpu_custom_call.1} parent=11 // pred_fallthru
          _
        // Predicated region
        $region65: #{tpu_custom_call.1} parent=11 // pred_check
          %p553 = pneg %p407
        $region66: #{tpu_custom_call.1} parent=11 // pred_check_branch
          %555 = sbr.rel (%p553) target = $region68
        $region67: #{tpu_custom_call.1} parent=11 // pred_region
          _
        $region68: #{tpu_custom_call.1} parent=11 // pred_fallthru
          _
      $region12: #{tpu_custom_call.1} parent=5 // pred_fallthru
        _
      %p556 = scmp.lt.s32.totalorder %s35, 2
      // Predicated region
      $region69: #{tpu_custom_call.1} parent=5 // pred_check
        %p557 = pneg %p556
      $region70: #{tpu_custom_call.1} parent=5 // pred_check_branch
        %559 = sbr.rel (%p557) target = $region72
      $region71: #{tpu_custom_call.1} parent=5 // pred_region
        // Predicated region
        $region73: #{tpu_custom_call.1} parent=71 // pred_check
          %p560 = pneg %p55
        $region74: #{tpu_custom_call.1} parent=71 // pred_check_branch
          %562 = sbr.rel (%p560) target = $region76
        $region75: #{tpu_custom_call.1} parent=71 // pred_region
          %s563 = sand.u32 %s45, 1
          %s564 = scalar_lea.sflag [#allocation3], %s563
          %s565 = sand.u32 %s45, 1
          %s566 = smul.addr %s565, 4
          %s567 = scalar_lea.vmem [#allocation2], %s566
          %569 = vsyncadd %s564, 0
          %s570 = smul.addr %s35, 4
          %s571 = scalar_lea.hbm %s0, %s570
          %s573 = sshll.u32 %s571, 4
          %s574 = int_to_ptr.hbm [resolvable:$true] %s573
          %s575 = sshll.u32 %s567, 4
          %s576 = int_to_ptr.vmem [resolvable:$true] %s575
          %578 = dma.hbm_to_vmem [thread:$0]  %s574, 64, %s576, %s564
        $region76: #{tpu_custom_call.1} parent=71 // pred_fallthru
          _
        // Predicated region
        $region77: #{tpu_custom_call.1} parent=71 // pred_check
          %p579 = pneg %p81
        $region78: #{tpu_custom_call.1} parent=71 // pred_check_branch
          %581 = sbr.rel (%p579) target = $region80
        $region79: #{tpu_custom_call.1} parent=71 // pred_region
          %s582 = sand.u32 %s35, 1
          %s583 = scalar_lea.sflag [#allocation6], %s582
          %s584 = sand.u32 %s71, 1
          %s585 = smul.addr %s584, 64
          %s586 = scalar_lea.vmem [#allocation5], %s585
          %588 = vsyncadd %s583, 0
          %s589 = smul.addr %s35, 16
          %s590 = smul.addr %s589, 4
          %s591 = scalar_lea.hbm %s1, %s590
          %s592 = sshll.u32 %s591, 4
          %s593 = int_to_ptr.hbm [resolvable:$true] %s592
          %s594 = sshll.u32 %s586, 4
          %s595 = int_to_ptr.vmem [resolvable:$true] %s594
          %600 = dma.hbm_to_vmem [thread:$0]  %s593, 1024, %s595, %s583, 64, 64, 4
        $region80: #{tpu_custom_call.1} parent=71 // pred_fallthru
          _
        // Predicated region
        $region81: #{tpu_custom_call.1} parent=71 // pred_check
          %p601 = pneg %p107
        $region82: #{tpu_custom_call.1} parent=71 // pred_check_branch
          %603 = sbr.rel (%p601) target = $region84
        $region83: #{tpu_custom_call.1} parent=71 // pred_region
          %s604 = sand.u32 %s35, 1
          %s605 = scalar_lea.sflag [#allocation6], %s604
          %s606 = sand.u32 %s97, 1
          %s607 = smul.addr %s606, 64
          %s608 = scalar_lea.vmem [#allocation7], %s607
          %610 = vsyncadd %s605, 0
          %s611 = smul.addr %s35, 16
          %s612 = smul.addr %s611, 4
          %s613 = scalar_lea.hbm %s2, %s612
          %s614 = sshll.u32 %s613, 4
          %s615 = int_to_ptr.hbm [resolvable:$true] %s614
          %s616 = sshll.u32 %s608, 4
          %s617 = int_to_ptr.vmem [resolvable:$true] %s616
          %622 = dma.hbm_to_vmem [thread:$0]  %s615, 1024, %s617, %s605, 64, 64, 4
        $region84: #{tpu_custom_call.1} parent=71 // pred_fallthru
          _
      $region72: #{tpu_custom_call.1} parent=5 // pred_fallthru
        _
      %p623 = scmp.le.s32.totalorder 1, %s35
      %p624 = scmp.lt.s32.totalorder %s35, 3
      %p625 = pnand %p623, %p624
      %p626 = pneg %p625
      // Predicated region
      $region85: #{tpu_custom_call.1} parent=5 // pred_check
        _
      $region86: #{tpu_custom_call.1} parent=5 // pred_check_branch
        %628 = sbr.rel (%p625) target = $region88
      $region87: #{tpu_custom_call.1} parent=5 // pred_region
        %s629 = ssub.s32 %s35, 1
        %s630 = sand.u32 %s48, 1
        %s631 = scalar_lea.sflag [#allocation3], %s630
        %s632 = sand.u32 %s48, 1
        %s633 = smul.addr %s632, 4
        %s634 = scalar_lea.vmem [#allocation2], %s633
        // Predicated region
        $region89: #{tpu_custom_call.1} parent=87 // pred_check
          %p635 = pneg %p61
        $region90: #{tpu_custom_call.1} parent=87 // pred_check_branch
          %637 = sbr.rel (%p635) target = $region92
        $region91: #{tpu_custom_call.1} parent=87 // pred_region
          %639 = dma.done %s631, 64
        $region92: #{tpu_custom_call.1} parent=87 // pred_fallthru
          _
        %s640 = sand.u32 %s40, 1
        %s641 = scalar_lea.sflag [#allocation6], %s640
        %s642 = sand.u32 %s74, 1
        %s643 = smul.addr %s642, 64
        %s644 = scalar_lea.vmem [#allocation5], %s643
        // Predicated region
        $region93: #{tpu_custom_call.1} parent=87 // pred_check
          %p645 = pneg %p87
        $region94: #{tpu_custom_call.1} parent=87 // pred_check_branch
          %647 = sbr.rel (%p645) target = $region96
        $region95: #{tpu_custom_call.1} parent=87 // pred_region
          %649 = dma.done %s641, 1024
        $region96: #{tpu_custom_call.1} parent=87 // pred_fallthru
          _
        %s650 = sand.u32 %s40, 1
        %s651 = scalar_lea.sflag [#allocation6], %s650
        %s652 = sand.u32 %s100, 1
        %s653 = smul.addr %s652, 64
        %s654 = scalar_lea.vmem [#allocation7], %s653
        // Predicated region
        $region97: #{tpu_custom_call.1} parent=87 // pred_check
          %p655 = pneg %p113
        $region98: #{tpu_custom_call.1} parent=87 // pred_check_branch
          %657 = sbr.rel (%p655) target = $region100
        $region99: #{tpu_custom_call.1} parent=87 // pred_region
          %659 = dma.done %s651, 1024
        $region100: #{tpu_custom_call.1} parent=87 // pred_fallthru
          _
        // Predicated region
        $region101: #{tpu_custom_call.1} parent=87 // pred_check
          %p660 = pneg %p134
        $region102: #{tpu_custom_call.1} parent=87 // pred_check_branch
          %662 = sbr.rel (%p660) target = $region104
        $region103: #{tpu_custom_call.1} parent=87 // pred_region
          %664 = dma.done [#allocation9], 1024
        $region104: #{tpu_custom_call.1} parent=87 // pred_fallthru
          _
        // Predicated region
        $region105: #{tpu_custom_call.1} parent=87 // pred_check
          %p665 = pneg %p176
        $region106: #{tpu_custom_call.1} parent=87 // pred_check_branch
          %667 = sbr.rel (%p665) target = $region108
        $region107: #{tpu_custom_call.1} parent=87 // pred_region
          %669 = dma.done [#allocation9], 1024
        $region108: #{tpu_custom_call.1} parent=87 // pred_fallthru
          _
        // Predicated region
        $region109: #{tpu_custom_call.1} parent=87 // pred_check
          %p670 = pneg %p218
        $region110: #{tpu_custom_call.1} parent=87 // pred_check_branch
          %672 = sbr.rel (%p670) target = $region112
        $region111: #{tpu_custom_call.1} parent=87 // pred_region
          %674 = dma.done [#allocation12], 1024
        $region112: #{tpu_custom_call.1} parent=87 // pred_fallthru
          _
        // Predicated region
        $region113: #{tpu_custom_call.1} parent=87 // pred_check
          %p675 = pneg %p260
        $region114: #{tpu_custom_call.1} parent=87 // pred_check_branch
          %677 = sbr.rel (%p675) target = $region116
        $region115: #{tpu_custom_call.1} parent=87 // pred_region
          %679 = dma.done [#allocation12], 1024
        $region116: #{tpu_custom_call.1} parent=87 // pred_fallthru
          _
        // Predicated region
        $region117: #{tpu_custom_call.1} parent=87 // pred_check
          %p680 = pneg %p344
        $region118: #{tpu_custom_call.1} parent=87 // pred_check_branch
          %682 = sbr.rel (%p680) target = $region120
        $region119: #{tpu_custom_call.1} parent=87 // pred_region
          %684 = dma.done [#allocation15], 1024
        $region120: #{tpu_custom_call.1} parent=87 // pred_fallthru
          _
        // Predicated region
        $region121: #{tpu_custom_call.1} parent=87 // pred_check
          %p685 = pneg %p386
        $region122: #{tpu_custom_call.1} parent=87 // pred_check_branch
          %687 = sbr.rel (%p685) target = $region124
        $region123: #{tpu_custom_call.1} parent=87 // pred_region
          %689 = dma.done [#allocation15], 1024
        $region124: #{tpu_custom_call.1} parent=87 // pred_fallthru
          _
        %s690 = sand.u32 %s48, 1
        %s691 = scalar_lea.sflag [#allocation3], %s690
        %s692 = sand.u32 %s48, 1
        %s693 = smul.addr %s692, 4
        %s694 = scalar_lea.vmem [#allocation2], %s693
        %p695 = pneg %p61
        %p696 = pneg %p58
        %s697 = sand.u32 %s40, 1
        %s698 = scalar_lea.sflag [#allocation6], %s697
        %s699 = sand.u32 %s74, 1
        %s700 = smul.addr %s699, 64
        %s701 = scalar_lea.vmem [#allocation5], %s700
        %p702 = pneg %p87
        %p703 = pneg %p84
        %s704 = sand.u32 %s40, 1
        %s705 = scalar_lea.sflag [#allocation6], %s704
        %s706 = sand.u32 %s100, 1
        %s707 = smul.addr %s706, 64
        %s708 = scalar_lea.vmem [#allocation7], %s707
        %p709 = pneg %p113
        %p710 = pneg %p110
        %p711 = pneg %p134
        %p712 = pneg %p131
        %p713 = pneg %p155
        %p714 = pneg %p152
        %p715 = pneg %p176
        %p716 = pneg %p173
        %p717 = pneg %p197
        %p718 = pneg %p194
        %p719 = pneg %p218
        %p720 = pneg %p215
        %p721 = pneg %p239
        %p722 = pneg %p236
        %p723 = pneg %p260
        %p724 = pneg %p257
        %p725 = pneg %p281
        %p726 = pneg %p278
        %p727 = pneg %p302
        %p728 = pneg %p299
        %p729 = pneg %p323
        %p730 = pneg %p320
        %p731 = pneg %p344
        %p732 = pneg %p341
        %p733 = pneg %p365
        %p734 = pneg %p362
        %p735 = pneg %p386
        %p736 = pneg %p383
        %p737 = pneg %p407
        %p738 = pneg %p404
        %p739 = pneg %p433
        %p740 = pneg %p430
        %s741 = sand.u32 %s420, 1
        %s742 = scalar_lea.sflag [#allocation4], %s741
        %s743 = sand.u32 %s420, 1
        %s744 = smul.addr %s743, 8
        %s745 = scalar_lea.vmem [#allocation17], %s744
        %v746 = vld [vmem:[%s634] sm:$0xf]
        %v747 = vld [vmem:[#allocation8] sm:$0xf]
        %v748 = vld [vmem:[#allocation8 + $0x4] sm:$0xf]
        %v749 = vld [vmem:[#allocation8 + $0x8] sm:$0xf]
        %v750 = vld [vmem:[#allocation8 + $0xc] sm:$0xf]
        %v751 = vld [vmem:[#allocation8 + $0x10] sm:$0xf]
        %v752 = vld [vmem:[#allocation8 + $0x14] sm:$0xf]
        %v753 = vld [vmem:[#allocation8 + $0x18] sm:$0xf]
        %v754 = vld [vmem:[#allocation8 + $0x1c] sm:$0xf]
        %v755 = vld [vmem:[#allocation8 + $0x20] sm:$0xf]
        %v756 = vld [vmem:[#allocation8 + $0x24] sm:$0xf]
        %v757 = vld [vmem:[#allocation8 + $0x28] sm:$0xf]
        %v758 = vld [vmem:[#allocation8 + $0x2c] sm:$0xf]
        %v759 = vld [vmem:[#allocation8 + $0x30] sm:$0xf]
        %v760 = vld [vmem:[#allocation8 + $0x34] sm:$0xf]
        %v761 = vld [vmem:[#allocation8 + $0x38] sm:$0xf]
        %v762 = vld [vmem:[#allocation8 + $0x3c] sm:$0xf]
        %v763 = vld [vmem:[%s4] sm:$0x1]
        %v765 = vperm.slane %v763, 0
        %v783 = vunpack.c.l.b16 %v747
        %v784 = vunpack.c.l.b16 %v748
        %v785 = vunpack.c.l.b16 %v749
        %v786 = vunpack.c.l.b16 %v750
        %v787 = vunpack.c.l.b16 %v751
        %v788 = vunpack.c.l.b16 %v752
        %v789 = vunpack.c.l.b16 %v753
        %v790 = vunpack.c.l.b16 %v754
        %v791 = vunpack.c.l.b16 %v755
        %v792 = vunpack.c.l.b16 %v756
        %v793 = vunpack.c.l.b16 %v757
        %v794 = vunpack.c.l.b16 %v758
        %v795 = vunpack.c.l.b16 %v759
        %v796 = vunpack.c.l.b16 %v760
        %v797 = vunpack.c.l.b16 %v761
        %v798 = vunpack.c.l.b16 %v762
        %v799 = vpack.c.b16 %v784, %v783
        %v800 = vpack.c.b16 %v786, %v785
        %v801 = vpack.c.b16 %v788, %v787
        %v802 = vpack.c.b16 %v790, %v789
        %v803 = vpack.c.b16 %v792, %v791
        %v804 = vpack.c.b16 %v794, %v793
        %v805 = vpack.c.b16 %v796, %v795
        %v806 = vpack.c.b16 %v798, %v797
        %815 = vmatpush.bf16.msra.mxu0 %v806
        %816 = vmatpush.bf16.msra.mxu0 %v805
        %817 = vmatpush.bf16.msra.mxu0 %v804
        %818 = vmatpush.bf16.msra.mxu0 %v803
        %819 = vmatpush.bf16.msra.mxu0 %v802
        %820 = vmatpush.bf16.msra.mxu0 %v801
        %821 = vmatpush.bf16.msra.mxu0 %v800
        %822 = vmatpush.bf16.msra.mxu0 %v799
        %823 = vmatmul.bf16.gmra.mxu0 %v746
        %v824 = vpop.f32.mrf.mxu0
        %v825 = vadd.f32 %v765, %v824
        %v826 = vpop.f32.mrf.mxu0
        %827 = vdwg.mxu0
        %v828 = vmax.f32 %v825, 0.0
        %v829 = vpack.c.bf16 %v828, %v828
        %v830 = vld [vmem:[#allocation10] sm:$0xf]
        %v831 = vld [vmem:[#allocation10 + $0x4] sm:$0xf]
        %v832 = vld [vmem:[#allocation10 + $0x8] sm:$0xf]
        %v833 = vld [vmem:[#allocation10 + $0xc] sm:$0xf]
        %v834 = vld [vmem:[#allocation10 + $0x10] sm:$0xf]
        %v835 = vld [vmem:[#allocation10 + $0x14] sm:$0xf]
        %v836 = vld [vmem:[#allocation10 + $0x18] sm:$0xf]
        %v837 = vld [vmem:[#allocation10 + $0x1c] sm:$0xf]
        %v838 = vld [vmem:[#allocation10 + $0x20] sm:$0xf]
        %v839 = vld [vmem:[#allocation10 + $0x24] sm:$0xf]
        %v840 = vld [vmem:[#allocation10 + $0x28] sm:$0xf]
        %v841 = vld [vmem:[#allocation10 + $0x2c] sm:$0xf]
        %v842 = vld [vmem:[#allocation10 + $0x30] sm:$0xf]
        %v843 = vld [vmem:[#allocation10 + $0x34] sm:$0xf]
        %v844 = vld [vmem:[#allocation10 + $0x38] sm:$0xf]
        %v845 = vld [vmem:[#allocation10 + $0x3c] sm:$0xf]
        %v846 = vld [vmem:[%s6] sm:$0x1]
        %v848 = vperm.slane %v846, 0
        %v866 = vunpack.c.l.b16 %v830
        %v867 = vunpack.c.l.b16 %v831
        %v868 = vunpack.c.l.b16 %v832
        %v869 = vunpack.c.l.b16 %v833
        %v870 = vunpack.c.l.b16 %v834
        %v871 = vunpack.c.l.b16 %v835
        %v872 = vunpack.c.l.b16 %v836
        %v873 = vunpack.c.l.b16 %v837
        %v874 = vunpack.c.l.b16 %v838
        %v875 = vunpack.c.l.b16 %v839
        %v876 = vunpack.c.l.b16 %v840
        %v877 = vunpack.c.l.b16 %v841
        %v878 = vunpack.c.l.b16 %v842
        %v879 = vunpack.c.l.b16 %v843
        %v880 = vunpack.c.l.b16 %v844
        %v881 = vunpack.c.l.b16 %v845
        %v882 = vpack.c.b16 %v867, %v866
        %v883 = vpack.c.b16 %v869, %v868
        %v884 = vpack.c.b16 %v871, %v870
        %v885 = vpack.c.b16 %v873, %v872
        %v886 = vpack.c.b16 %v875, %v874
        %v887 = vpack.c.b16 %v877, %v876
        %v888 = vpack.c.b16 %v879, %v878
        %v889 = vpack.c.b16 %v881, %v880
        %898 = vmatpush.bf16.msra.mxu0 %v889
        %899 = vmatpush.bf16.msra.mxu0 %v888
        %900 = vmatpush.bf16.msra.mxu0 %v887
        %901 = vmatpush.bf16.msra.mxu0 %v886
        %902 = vmatpush.bf16.msra.mxu0 %v885
        %903 = vmatpush.bf16.msra.mxu0 %v884
        %904 = vmatpush.bf16.msra.mxu0 %v883
        %905 = vmatpush.bf16.msra.mxu0 %v882
        %906 = vmatmul.bf16.gmra.mxu0 %v829
        %v907 = vpop.f32.mrf.mxu0
        %v908 = vadd.f32 %v848, %v907
        %v909 = vpop.f32.mrf.mxu0
        %910 = vdwg.mxu0
        %v911 = vld [vmem:[%s644] sm:$0xf]
        %v912 = vld [vmem:[%s644 + $0x4] sm:$0xf]
        %v913 = vld [vmem:[%s644 + $0x8] sm:$0xf]
        %v914 = vld [vmem:[%s644 + $0xc] sm:$0xf]
        %v915 = vld [vmem:[%s644 + $0x10] sm:$0xf]
        %v916 = vld [vmem:[%s644 + $0x14] sm:$0xf]
        %v917 = vld [vmem:[%s644 + $0x18] sm:$0xf]
        %v918 = vld [vmem:[%s644 + $0x1c] sm:$0xf]
        %v919 = vld [vmem:[%s644 + $0x20] sm:$0xf]
        %v920 = vld [vmem:[%s644 + $0x24] sm:$0xf]
        %v921 = vld [vmem:[%s644 + $0x28] sm:$0xf]
        %v922 = vld [vmem:[%s644 + $0x2c] sm:$0xf]
        %v923 = vld [vmem:[%s644 + $0x30] sm:$0xf]
        %v924 = vld [vmem:[%s644 + $0x34] sm:$0xf]
        %v925 = vld [vmem:[%s644 + $0x38] sm:$0xf]
        %v926 = vld [vmem:[%s644 + $0x3c] sm:$0xf]
        %v927 = vld [vmem:[#allocation11] sm:$0xf]
        %v928 = vld [vmem:[#allocation11 + $0x4] sm:$0xf]
        %v929 = vld [vmem:[#allocation11 + $0x8] sm:$0xf]
        %v930 = vld [vmem:[#allocation11 + $0xc] sm:$0xf]
        %v931 = vld [vmem:[#allocation11 + $0x10] sm:$0xf]
        %v932 = vld [vmem:[#allocation11 + $0x14] sm:$0xf]
        %v933 = vld [vmem:[#allocation11 + $0x18] sm:$0xf]
        %v934 = vld [vmem:[#allocation11 + $0x1c] sm:$0xf]
        %v935 = vld [vmem:[#allocation11 + $0x20] sm:$0xf]
        %v936 = vld [vmem:[#allocation11 + $0x24] sm:$0xf]
        %v937 = vld [vmem:[#allocation11 + $0x28] sm:$0xf]
        %v938 = vld [vmem:[#allocation11 + $0x2c] sm:$0xf]
        %v939 = vld [vmem:[#allocation11 + $0x30] sm:$0xf]
        %v940 = vld [vmem:[#allocation11 + $0x34] sm:$0xf]
        %v941 = vld [vmem:[#allocation11 + $0x38] sm:$0xf]
        %v942 = vld [vmem:[#allocation11 + $0x3c] sm:$0xf]
        %v943 = vld [vmem:[%s8] sm:$0x1]
        %v945 = vperm.slane %v943, 0
        %v963 = vunpack.c.l.b16 %v911
        %v964 = vunpack.c.l.b16 %v912
        %v965 = vunpack.c.l.b16 %v913
        %v966 = vunpack.c.l.b16 %v914
        %v967 = vunpack.c.l.b16 %v915
        %v968 = vunpack.c.l.b16 %v916
        %v969 = vunpack.c.l.b16 %v917
        %v970 = vunpack.c.l.b16 %v918
        %v971 = vunpack.c.l.b16 %v919
        %v972 = vunpack.c.l.b16 %v920
        %v973 = vunpack.c.l.b16 %v921
        %v974 = vunpack.c.l.b16 %v922
        %v975 = vunpack.c.l.b16 %v923
        %v976 = vunpack.c.l.b16 %v924
        %v977 = vunpack.c.l.b16 %v925
        %v978 = vunpack.c.l.b16 %v926
        %v979 = vpack.c.b16 %v964, %v963
        %v980 = vpack.c.b16 %v966, %v965
        %v981 = vpack.c.b16 %v968, %v967
        %v982 = vpack.c.b16 %v970, %v969
        %v983 = vpack.c.b16 %v972, %v971
        %v984 = vpack.c.b16 %v974, %v973
        %v985 = vpack.c.b16 %v976, %v975
        %v986 = vpack.c.b16 %v978, %v977
        %v1011 = vunpack.c.l.b16 %v927
        %v1012 = vunpack.c.l.b16 %v928
        %v1013 = vunpack.c.l.b16 %v929
        %v1014 = vunpack.c.l.b16 %v930
        %v1015 = vunpack.c.l.b16 %v931
        %v1016 = vunpack.c.l.b16 %v932
        %v1017 = vunpack.c.l.b16 %v933
        %v1018 = vunpack.c.l.b16 %v934
        %v1019 = vunpack.c.l.b16 %v935
        %v1020 = vunpack.c.l.b16 %v936
        %v1021 = vunpack.c.l.b16 %v937
        %v1022 = vunpack.c.l.b16 %v938
        %v1023 = vunpack.c.l.b16 %v939
        %v1024 = vunpack.c.l.b16 %v940
        %v1025 = vunpack.c.l.b16 %v941
        %v1026 = vunpack.c.l.b16 %v942
        %v1027 = vpack.c.b16 %v1012, %v1011
        %v1028 = vpack.c.b16 %v1014, %v1013
        %v1029 = vpack.c.b16 %v1016, %v1015
        %v1030 = vpack.c.b16 %v1018, %v1017
        %v1031 = vpack.c.b16 %v1020, %v1019
        %v1032 = vpack.c.b16 %v1022, %v1021
        %v1033 = vpack.c.b16 %v1024, %v1023
        %v1034 = vpack.c.b16 %v1026, %v1025
        %1043 = vmatpush.bf16.msra.mxu0 %v1034
        %1044 = vmatpush.bf16.msra.mxu0 %v1033
        %1045 = vmatpush.bf16.msra.mxu0 %v1032
        %1046 = vmatpush.bf16.msra.mxu0 %v1031
        %1047 = vmatpush.bf16.msra.mxu0 %v1030
        %1048 = vmatpush.bf16.msra.mxu0 %v1029
        %1049 = vmatpush.bf16.msra.mxu0 %v1028
        %1050 = vmatpush.bf16.msra.mxu0 %v1027
        %1051 = vmatmul.bf16.gmra.mxu0 %v979
        %v1052 = vpop.f32.mrf.mxu0
        %v1053 = vadd.f32 %v945, %v1052
        %v1054 = vpop.f32.mrf.mxu0
        %v1055 = vadd.f32 %v945, %v1054
        %1056 = vmatmul.bf16.gmra.mxu0 %v980
        %v1057 = vpop.f32.mrf.mxu0
        %v1058 = vadd.f32 %v945, %v1057
        %v1059 = vpop.f32.mrf.mxu0
        %v1060 = vadd.f32 %v945, %v1059
        %1061 = vmatmul.bf16.gmra.mxu0 %v981
        %v1062 = vpop.f32.mrf.mxu0
        %v1063 = vadd.f32 %v945, %v1062
        %v1064 = vpop.f32.mrf.mxu0
        %v1065 = vadd.f32 %v945, %v1064
        %1066 = vmatmul.bf16.gmra.mxu0 %v982
        %v1067 = vpop.f32.mrf.mxu0
        %v1068 = vadd.f32 %v945, %v1067
        %v1069 = vpop.f32.mrf.mxu0
        %v1070 = vadd.f32 %v945, %v1069
        %1071 = vmatmul.bf16.gmra.mxu0 %v983
        %v1072 = vpop.f32.mrf.mxu0
        %v1073 = vadd.f32 %v945, %v1072
        %v1074 = vpop.f32.mrf.mxu0
        %v1075 = vadd.f32 %v945, %v1074
        %1076 = vmatmul.bf16.gmra.mxu0 %v984
        %v1077 = vpop.f32.mrf.mxu0
        %v1078 = vadd.f32 %v945, %v1077
        %v1079 = vpop.f32.mrf.mxu0
        %v1080 = vadd.f32 %v945, %v1079
        %1081 = vmatmul.bf16.gmra.mxu0 %v985
        %v1082 = vpop.f32.mrf.mxu0
        %v1083 = vadd.f32 %v945, %v1082
        %v1084 = vpop.f32.mrf.mxu0
        %v1085 = vadd.f32 %v945, %v1084
        %1086 = vmatmul.bf16.gmra.mxu0 %v986
        %v1087 = vpop.f32.mrf.mxu0
        %v1088 = vadd.f32 %v945, %v1087
        %v1089 = vpop.f32.mrf.mxu0
        %v1090 = vadd.f32 %v945, %v1089
        %1091 = vdwg.mxu0
        %v1092 = vmax.f32 %v1053, 0.0
        %v1093 = vmax.f32 %v1055, 0.0
        %v1094 = vmax.f32 %v1058, 0.0
        %v1095 = vmax.f32 %v1060, 0.0
        %v1096 = vmax.f32 %v1063, 0.0
        %v1097 = vmax.f32 %v1065, 0.0
        %v1098 = vmax.f32 %v1068, 0.0
        %v1099 = vmax.f32 %v1070, 0.0
        %v1100 = vmax.f32 %v1073, 0.0
        %v1101 = vmax.f32 %v1075, 0.0
        %v1102 = vmax.f32 %v1078, 0.0
        %v1103 = vmax.f32 %v1080, 0.0
        %v1104 = vmax.f32 %v1083, 0.0
        %v1105 = vmax.f32 %v1085, 0.0
        %v1106 = vmax.f32 %v1088, 0.0
        %v1107 = vmax.f32 %v1090, 0.0
        %v1108 = vpack.c.bf16 %v1093, %v1092
        %v1109 = vpack.c.bf16 %v1095, %v1094
        %v1110 = vpack.c.bf16 %v1097, %v1096
        %v1111 = vpack.c.bf16 %v1099, %v1098
        %v1112 = vpack.c.bf16 %v1101, %v1100
        %v1113 = vpack.c.bf16 %v1103, %v1102
        %v1114 = vpack.c.bf16 %v1105, %v1104
        %v1115 = vpack.c.bf16 %v1107, %v1106
        %v1116 = vld [vmem:[#allocation13] sm:$0xf]
        %v1117 = vld [vmem:[#allocation13 + $0x4] sm:$0xf]
        %v1118 = vld [vmem:[#allocation13 + $0x8] sm:$0xf]
        %v1119 = vld [vmem:[#allocation13 + $0xc] sm:$0xf]
        %v1120 = vld [vmem:[#allocation13 + $0x10] sm:$0xf]
        %v1121 = vld [vmem:[#allocation13 + $0x14] sm:$0xf]
        %v1122 = vld [vmem:[#allocation13 + $0x18] sm:$0xf]
        %v1123 = vld [vmem:[#allocation13 + $0x1c] sm:$0xf]
        %v1124 = vld [vmem:[#allocation13 + $0x20] sm:$0xf]
        %v1125 = vld [vmem:[#allocation13 + $0x24] sm:$0xf]
        %v1126 = vld [vmem:[#allocation13 + $0x28] sm:$0xf]
        %v1127 = vld [vmem:[#allocation13 + $0x2c] sm:$0xf]
        %v1128 = vld [vmem:[#allocation13 + $0x30] sm:$0xf]
        %v1129 = vld [vmem:[#allocation13 + $0x34] sm:$0xf]
        %v1130 = vld [vmem:[#allocation13 + $0x38] sm:$0xf]
        %v1131 = vld [vmem:[#allocation13 + $0x3c] sm:$0xf]
        %v1132 = vld [vmem:[%s10] sm:$0x1]
        %v1134 = vperm.slane %v1132, 0
        %v1152 = vunpack.c.l.b16 %v1116
        %v1153 = vunpack.c.l.b16 %v1117
        %v1154 = vunpack.c.l.b16 %v1118
        %v1155 = vunpack.c.l.b16 %v1119
        %v1156 = vunpack.c.l.b16 %v1120
        %v1157 = vunpack.c.l.b16 %v1121
        %v1158 = vunpack.c.l.b16 %v1122
        %v1159 = vunpack.c.l.b16 %v1123
        %v1160 = vunpack.c.l.b16 %v1124
        %v1161 = vunpack.c.l.b16 %v1125
        %v1162 = vunpack.c.l.b16 %v1126
        %v1163 = vunpack.c.l.b16 %v1127
        %v1164 = vunpack.c.l.b16 %v1128
        %v1165 = vunpack.c.l.b16 %v1129
        %v1166 = vunpack.c.l.b16 %v1130
        %v1167 = vunpack.c.l.b16 %v1131
        %v1168 = vpack.c.b16 %v1153, %v1152
        %v1169 = vpack.c.b16 %v1155, %v1154
        %v1170 = vpack.c.b16 %v1157, %v1156
        %v1171 = vpack.c.b16 %v1159, %v1158
        %v1172 = vpack.c.b16 %v1161, %v1160
        %v1173 = vpack.c.b16 %v1163, %v1162
        %v1174 = vpack.c.b16 %v1165, %v1164
        %v1175 = vpack.c.b16 %v1167, %v1166
        %1184 = vmatpush.bf16.msra.mxu0 %v1175
        %1185 = vmatpush.bf16.msra.mxu0 %v1174
        %1186 = vmatpush.bf16.msra.mxu0 %v1173
        %1187 = vmatpush.bf16.msra.mxu0 %v1172
        %1188 = vmatpush.bf16.msra.mxu0 %v1171
        %1189 = vmatpush.bf16.msra.mxu0 %v1170
        %1190 = vmatpush.bf16.msra.mxu0 %v1169
        %1191 = vmatpush.bf16.msra.mxu0 %v1168
        %1192 = vmatmul.bf16.gmra.mxu0 %v1108
        %v1193 = vpop.f32.mrf.mxu0
        %v1194 = vadd.f32 %v1134, %v1193
        %v1195 = vpop.f32.mrf.mxu0
        %v1196 = vadd.f32 %v1134, %v1195
        %1197 = vmatmul.bf16.gmra.mxu0 %v1109
        %v1198 = vpop.f32.mrf.mxu0
        %v1199 = vadd.f32 %v1134, %v1198
        %v1200 = vpop.f32.mrf.mxu0
        %v1201 = vadd.f32 %v1134, %v1200
        %1202 = vmatmul.bf16.gmra.mxu0 %v1110
        %v1203 = vpop.f32.mrf.mxu0
        %v1204 = vadd.f32 %v1134, %v1203
        %v1205 = vpop.f32.mrf.mxu0
        %v1206 = vadd.f32 %v1134, %v1205
        %1207 = vmatmul.bf16.gmra.mxu0 %v1111
        %v1208 = vpop.f32.mrf.mxu0
        %v1209 = vadd.f32 %v1134, %v1208
        %v1210 = vpop.f32.mrf.mxu0
        %v1211 = vadd.f32 %v1134, %v1210
        %1212 = vmatmul.bf16.gmra.mxu0 %v1112
        %v1213 = vpop.f32.mrf.mxu0
        %v1214 = vadd.f32 %v1134, %v1213
        %v1215 = vpop.f32.mrf.mxu0
        %v1216 = vadd.f32 %v1134, %v1215
        %1217 = vmatmul.bf16.gmra.mxu0 %v1113
        %v1218 = vpop.f32.mrf.mxu0
        %v1219 = vadd.f32 %v1134, %v1218
        %v1220 = vpop.f32.mrf.mxu0
        %v1221 = vadd.f32 %v1134, %v1220
        %1222 = vmatmul.bf16.gmra.mxu0 %v1114
        %v1223 = vpop.f32.mrf.mxu0
        %v1224 = vadd.f32 %v1134, %v1223
        %v1225 = vpop.f32.mrf.mxu0
        %v1226 = vadd.f32 %v1134, %v1225
        %1227 = vmatmul.bf16.gmra.mxu0 %v1115
        %v1228 = vpop.f32.mrf.mxu0
        %v1229 = vadd.f32 %v1134, %v1228
        %v1230 = vpop.f32.mrf.mxu0
        %v1231 = vadd.f32 %v1134, %v1230
        %1232 = vdwg.mxu0
        %1233 = vadd.xlane.f32.xlu0 %v1194
        %v1234 = vpop.xlane.xlu0 %1233
        %1235 = vadd.xlane.f32.xlu0 %v1196
        %v1236 = vpop.xlane.xlu0 %1235
        %1237 = vadd.xlane.f32.xlu0 %v1199
        %v1238 = vpop.xlane.xlu0 %1237
        %1239 = vadd.xlane.f32.xlu0 %v1201
        %v1240 = vpop.xlane.xlu0 %1239
        %1241 = vadd.xlane.f32.xlu0 %v1204
        %v1242 = vpop.xlane.xlu0 %1241
        %1243 = vadd.xlane.f32.xlu0 %v1206
        %v1244 = vpop.xlane.xlu0 %1243
        %1245 = vadd.xlane.f32.xlu0 %v1209
        %v1246 = vpop.xlane.xlu0 %1245
        %1247 = vadd.xlane.f32.xlu0 %v1211
        %v1248 = vpop.xlane.xlu0 %1247
        %1249 = vadd.xlane.f32.xlu0 %v1214
        %v1250 = vpop.xlane.xlu0 %1249
        %1251 = vadd.xlane.f32.xlu0 %v1216
        %v1252 = vpop.xlane.xlu0 %1251
        %1253 = vadd.xlane.f32.xlu0 %v1219
        %v1254 = vpop.xlane.xlu0 %1253
        %1255 = vadd.xlane.f32.xlu0 %v1221
        %v1256 = vpop.xlane.xlu0 %1255
        %1257 = vadd.xlane.f32.xlu0 %v1224
        %v1258 = vpop.xlane.xlu0 %1257
        %1259 = vadd.xlane.f32.xlu0 %v1226
        %v1260 = vpop.xlane.xlu0 %1259
        %1261 = vadd.xlane.f32.xlu0 %v1229
        %v1262 = vpop.xlane.xlu0 %1261
        %1263 = vadd.xlane.f32.xlu0 %v1231
        %v1264 = vpop.xlane.xlu0 %1263
        %v1265 = vmul.f32 %v1234, 0.0625
        %v1266 = vmul.f32 %v1236, 0.0625
        %v1267 = vmul.f32 %v1238, 0.0625
        %v1268 = vmul.f32 %v1240, 0.0625
        %v1269 = vmul.f32 %v1242, 0.0625
        %v1270 = vmul.f32 %v1244, 0.0625
        %v1271 = vmul.f32 %v1246, 0.0625
        %v1272 = vmul.f32 %v1248, 0.0625
        %v1273 = vmul.f32 %v1250, 0.0625
        %v1274 = vmul.f32 %v1252, 0.0625
        %v1275 = vmul.f32 %v1254, 0.0625
        %v1276 = vmul.f32 %v1256, 0.0625
        %v1277 = vmul.f32 %v1258, 0.0625
        %v1278 = vmul.f32 %v1260, 0.0625
        %v1279 = vmul.f32 %v1262, 0.0625
        %v1280 = vmul.f32 %v1264, 0.0625
        %v1281 = vmul.f32 %v1194, %v1194
        %v1282 = vmul.f32 %v1196, %v1196
        %v1283 = vmul.f32 %v1199, %v1199
        %v1284 = vmul.f32 %v1201, %v1201
        %v1285 = vmul.f32 %v1204, %v1204
        %v1286 = vmul.f32 %v1206, %v1206
        %v1287 = vmul.f32 %v1209, %v1209
        %v1288 = vmul.f32 %v1211, %v1211
        %v1289 = vmul.f32 %v1214, %v1214
        %v1290 = vmul.f32 %v1216, %v1216
        %v1291 = vmul.f32 %v1219, %v1219
        %v1292 = vmul.f32 %v1221, %v1221
        %v1293 = vmul.f32 %v1224, %v1224
        %v1294 = vmul.f32 %v1226, %v1226
        %v1295 = vmul.f32 %v1229, %v1229
        %v1296 = vmul.f32 %v1231, %v1231
        %1297 = vadd.xlane.f32.xlu0 %v1281
        %v1298 = vpop.xlane.xlu0 %1297
        %1299 = vadd.xlane.f32.xlu0 %v1282
        %v1300 = vpop.xlane.xlu0 %1299
        %1301 = vadd.xlane.f32.xlu0 %v1283
        %v1302 = vpop.xlane.xlu0 %1301
        %1303 = vadd.xlane.f32.xlu0 %v1284
        %v1304 = vpop.xlane.xlu0 %1303
        %1305 = vadd.xlane.f32.xlu0 %v1285
        %v1306 = vpop.xlane.xlu0 %1305
        %1307 = vadd.xlane.f32.xlu0 %v1286
        %v1308 = vpop.xlane.xlu0 %1307
        %1309 = vadd.xlane.f32.xlu0 %v1287
        %v1310 = vpop.xlane.xlu0 %1309
        %1311 = vadd.xlane.f32.xlu0 %v1288
        %v1312 = vpop.xlane.xlu0 %1311
        %1313 = vadd.xlane.f32.xlu0 %v1289
        %v1314 = vpop.xlane.xlu0 %1313
        %1315 = vadd.xlane.f32.xlu0 %v1290
        %v1316 = vpop.xlane.xlu0 %1315
        %1317 = vadd.xlane.f32.xlu0 %v1291
        %v1318 = vpop.xlane.xlu0 %1317
        %1319 = vadd.xlane.f32.xlu0 %v1292
        %v1320 = vpop.xlane.xlu0 %1319
        %1321 = vadd.xlane.f32.xlu0 %v1293
        %v1322 = vpop.xlane.xlu0 %1321
        %1323 = vadd.xlane.f32.xlu0 %v1294
        %v1324 = vpop.xlane.xlu0 %1323
        %1325 = vadd.xlane.f32.xlu0 %v1295
        %v1326 = vpop.xlane.xlu0 %1325
        %1327 = vadd.xlane.f32.xlu0 %v1296
        %v1328 = vpop.xlane.xlu0 %1327
        %v1329 = vmul.f32 %v1298, 0.0625
        %v1330 = vmul.f32 %v1300, 0.0625
        %v1331 = vmul.f32 %v1302, 0.0625
        %v1332 = vmul.f32 %v1304, 0.0625
        %v1333 = vmul.f32 %v1306, 0.0625
        %v1334 = vmul.f32 %v1308, 0.0625
        %v1335 = vmul.f32 %v1310, 0.0625
        %v1336 = vmul.f32 %v1312, 0.0625
        %v1337 = vmul.f32 %v1314, 0.0625
        %v1338 = vmul.f32 %v1316, 0.0625
        %v1339 = vmul.f32 %v1318, 0.0625
        %v1340 = vmul.f32 %v1320, 0.0625
        %v1341 = vmul.f32 %v1322, 0.0625
        %v1342 = vmul.f32 %v1324, 0.0625
        %v1343 = vmul.f32 %v1326, 0.0625
        %v1344 = vmul.f32 %v1328, 0.0625
        %v1345 = vmul.f32 %v1265, %v1265
        %v1346 = vmul.f32 %v1266, %v1266
        %v1347 = vmul.f32 %v1267, %v1267
        %v1348 = vmul.f32 %v1268, %v1268
        %v1349 = vmul.f32 %v1269, %v1269
        %v1350 = vmul.f32 %v1270, %v1270
        %v1351 = vmul.f32 %v1271, %v1271
        %v1352 = vmul.f32 %v1272, %v1272
        %v1353 = vmul.f32 %v1273, %v1273
        %v1354 = vmul.f32 %v1274, %v1274
        %v1355 = vmul.f32 %v1275, %v1275
        %v1356 = vmul.f32 %v1276, %v1276
        %v1357 = vmul.f32 %v1277, %v1277
        %v1358 = vmul.f32 %v1278, %v1278
        %v1359 = vmul.f32 %v1279, %v1279
        %v1360 = vmul.f32 %v1280, %v1280
        %v1361 = vsub.f32 %v1329, %v1345
        %v1362 = vsub.f32 %v1330, %v1346
        %v1363 = vsub.f32 %v1331, %v1347
        %v1364 = vsub.f32 %v1332, %v1348
        %v1365 = vsub.f32 %v1333, %v1349
        %v1366 = vsub.f32 %v1334, %v1350
        %v1367 = vsub.f32 %v1335, %v1351
        %v1368 = vsub.f32 %v1336, %v1352
        %v1369 = vsub.f32 %v1337, %v1353
        %v1370 = vsub.f32 %v1338, %v1354
        %v1371 = vsub.f32 %v1339, %v1355
        %v1372 = vsub.f32 %v1340, %v1356
        %v1373 = vsub.f32 %v1341, %v1357
        %v1374 = vsub.f32 %v1342, %v1358
        %v1375 = vsub.f32 %v1343, %v1359
        %v1376 = vsub.f32 %v1344, %v1360
        %v1377 = vsub.f32 %v1194, %v1265
        %v1378 = vsub.f32 %v1196, %v1266
        %v1379 = vsub.f32 %v1199, %v1267
        %v1380 = vsub.f32 %v1201, %v1268
        %v1381 = vsub.f32 %v1204, %v1269
        %v1382 = vsub.f32 %v1206, %v1270
        %v1383 = vsub.f32 %v1209, %v1271
        %v1384 = vsub.f32 %v1211, %v1272
        %v1385 = vsub.f32 %v1214, %v1273
        %v1386 = vsub.f32 %v1216, %v1274
        %v1387 = vsub.f32 %v1219, %v1275
        %v1388 = vsub.f32 %v1221, %v1276
        %v1389 = vsub.f32 %v1224, %v1277
        %v1390 = vsub.f32 %v1226, %v1278
        %v1391 = vsub.f32 %v1229, %v1279
        %v1392 = vsub.f32 %v1231, %v1280
        %v1393 = vadd.f32 %v1361, 16.0
        %v1394 = vadd.f32 %v1362, 16.0
        %v1395 = vadd.f32 %v1363, 16.0
        %v1396 = vadd.f32 %v1364, 16.0
        %v1397 = vadd.f32 %v1365, 16.0
        %v1398 = vadd.f32 %v1366, 16.0
        %v1399 = vadd.f32 %v1367, 16.0
        %v1400 = vadd.f32 %v1368, 16.0
        %v1401 = vadd.f32 %v1369, 16.0
        %v1402 = vadd.f32 %v1370, 16.0
        %v1403 = vadd.f32 %v1371, 16.0
        %v1404 = vadd.f32 %v1372, 16.0
        %v1405 = vadd.f32 %v1373, 16.0
        %v1406 = vadd.f32 %v1374, 16.0
        %v1407 = vadd.f32 %v1375, 16.0
        %v1408 = vadd.f32 %v1376, 16.0
        %v1409 = vrsqrt.pop %v1393
        %v1410 = vmul.f32 %v1409, %v1393
        %v1411 = vmul.f32 %v1410, %v1409
        %v1412 = vmul.f32 0.5, %v1411
        %v1413 = vsub.f32 1.5, %v1412
        %v1414 = vmul.f32 %v1409, %v1413
        %vm1415 = vweird.f32 %v1393
        %vm1416 = vweird.f32 %v1409
        %vm1417 = vmor %vm1415, %vm1416
        %v1418 = vsel %vm1417, %v1409, %v1414
        %v1419 = vrsqrt.pop %v1394
        %v1420 = vmul.f32 %v1419, %v1394
        %v1421 = vmul.f32 %v1420, %v1419
        %v1422 = vmul.f32 0.5, %v1421
        %v1423 = vsub.f32 1.5, %v1422
        %v1424 = vmul.f32 %v1419, %v1423
        %vm1425 = vweird.f32 %v1394
        %vm1426 = vweird.f32 %v1419
        %vm1427 = vmor %vm1425, %vm1426
        %v1428 = vsel %vm1427, %v1419, %v1424
        %v1429 = vrsqrt.pop %v1395
        %v1430 = vmul.f32 %v1429, %v1395
        %v1431 = vmul.f32 %v1430, %v1429
        %v1432 = vmul.f32 0.5, %v1431
        %v1433 = vsub.f32 1.5, %v1432
        %v1434 = vmul.f32 %v1429, %v1433
        %vm1435 = vweird.f32 %v1395
        %vm1436 = vweird.f32 %v1429
        %vm1437 = vmor %vm1435, %vm1436
        %v1438 = vsel %vm1437, %v1429, %v1434
        %v1439 = vrsqrt.pop %v1396
        %v1440 = vmul.f32 %v1439, %v1396
        %v1441 = vmul.f32 %v1440, %v1439
        %v1442 = vmul.f32 0.5, %v1441
        %v1443 = vsub.f32 1.5, %v1442
        %v1444 = vmul.f32 %v1439, %v1443
        %vm1445 = vweird.f32 %v1396
        %vm1446 = vweird.f32 %v1439
        %vm1447 = vmor %vm1445, %vm1446
        %v1448 = vsel %vm1447, %v1439, %v1444
        %v1449 = vrsqrt.pop %v1397
        %v1450 = vmul.f32 %v1449, %v1397
        %v1451 = vmul.f32 %v1450, %v1449
        %v1452 = vmul.f32 0.5, %v1451
        %v1453 = vsub.f32 1.5, %v1452
        %v1454 = vmul.f32 %v1449, %v1453
        %vm1455 = vweird.f32 %v1397
        %vm1456 = vweird.f32 %v1449
        %vm1457 = vmor %vm1455, %vm1456
        %v1458 = vsel %vm1457, %v1449, %v1454
        %v1459 = vrsqrt.pop %v1398
        %v1460 = vmul.f32 %v1459, %v1398
        %v1461 = vmul.f32 %v1460, %v1459
        %v1462 = vmul.f32 0.5, %v1461
        %v1463 = vsub.f32 1.5, %v1462
        %v1464 = vmul.f32 %v1459, %v1463
        %vm1465 = vweird.f32 %v1398
        %vm1466 = vweird.f32 %v1459
        %vm1467 = vmor %vm1465, %vm1466
        %v1468 = vsel %vm1467, %v1459, %v1464
        %v1469 = vrsqrt.pop %v1399
        %v1470 = vmul.f32 %v1469, %v1399
        %v1471 = vmul.f32 %v1470, %v1469
        %v1472 = vmul.f32 0.5, %v1471
        %v1473 = vsub.f32 1.5, %v1472
        %v1474 = vmul.f32 %v1469, %v1473
        %vm1475 = vweird.f32 %v1399
        %vm1476 = vweird.f32 %v1469
        %vm1477 = vmor %vm1475, %vm1476
        %v1478 = vsel %vm1477, %v1469, %v1474
        %v1479 = vrsqrt.pop %v1400
        %v1480 = vmul.f32 %v1479, %v1400
        %v1481 = vmul.f32 %v1480, %v1479
        %v1482 = vmul.f32 0.5, %v1481
        %v1483 = vsub.f32 1.5, %v1482
        %v1484 = vmul.f32 %v1479, %v1483
        %vm1485 = vweird.f32 %v1400
        %vm1486 = vweird.f32 %v1479
        %vm1487 = vmor %vm1485, %vm1486
        %v1488 = vsel %vm1487, %v1479, %v1484
        %v1489 = vrsqrt.pop %v1401
        %v1490 = vmul.f32 %v1489, %v1401
        %v1491 = vmul.f32 %v1490, %v1489
        %v1492 = vmul.f32 0.5, %v1491
        %v1493 = vsub.f32 1.5, %v1492
        %v1494 = vmul.f32 %v1489, %v1493
        %vm1495 = vweird.f32 %v1401
        %vm1496 = vweird.f32 %v1489
        %vm1497 = vmor %vm1495, %vm1496
        %v1498 = vsel %vm1497, %v1489, %v1494
        %v1499 = vrsqrt.pop %v1402
        %v1500 = vmul.f32 %v1499, %v1402
        %v1501 = vmul.f32 %v1500, %v1499
        %v1502 = vmul.f32 0.5, %v1501
        %v1503 = vsub.f32 1.5, %v1502
        %v1504 = vmul.f32 %v1499, %v1503
        %vm1505 = vweird.f32 %v1402
        %vm1506 = vweird.f32 %v1499
        %vm1507 = vmor %vm1505, %vm1506
        %v1508 = vsel %vm1507, %v1499, %v1504
        %v1509 = vrsqrt.pop %v1403
        %v1510 = vmul.f32 %v1509, %v1403
        %v1511 = vmul.f32 %v1510, %v1509
        %v1512 = vmul.f32 0.5, %v1511
        %v1513 = vsub.f32 1.5, %v1512
        %v1514 = vmul.f32 %v1509, %v1513
        %vm1515 = vweird.f32 %v1403
        %vm1516 = vweird.f32 %v1509
        %vm1517 = vmor %vm1515, %vm1516
        %v1518 = vsel %vm1517, %v1509, %v1514
        %v1519 = vrsqrt.pop %v1404
        %v1520 = vmul.f32 %v1519, %v1404
        %v1521 = vmul.f32 %v1520, %v1519
        %v1522 = vmul.f32 0.5, %v1521
        %v1523 = vsub.f32 1.5, %v1522
        %v1524 = vmul.f32 %v1519, %v1523
        %vm1525 = vweird.f32 %v1404
        %vm1526 = vweird.f32 %v1519
        %vm1527 = vmor %vm1525, %vm1526
        %v1528 = vsel %vm1527, %v1519, %v1524
        %v1529 = vrsqrt.pop %v1405
        %v1530 = vmul.f32 %v1529, %v1405
        %v1531 = vmul.f32 %v1530, %v1529
        %v1532 = vmul.f32 0.5, %v1531
        %v1533 = vsub.f32 1.5, %v1532
        %v1534 = vmul.f32 %v1529, %v1533
        %vm1535 = vweird.f32 %v1405
        %vm1536 = vweird.f32 %v1529
        %vm1537 = vmor %vm1535, %vm1536
        %v1538 = vsel %vm1537, %v1529, %v1534
        %v1539 = vrsqrt.pop %v1406
        %v1540 = vmul.f32 %v1539, %v1406
        %v1541 = vmul.f32 %v1540, %v1539
        %v1542 = vmul.f32 0.5, %v1541
        %v1543 = vsub.f32 1.5, %v1542
        %v1544 = vmul.f32 %v1539, %v1543
        %vm1545 = vweird.f32 %v1406
        %vm1546 = vweird.f32 %v1539
        %vm1547 = vmor %vm1545, %vm1546
        %v1548 = vsel %vm1547, %v1539, %v1544
        %v1549 = vrsqrt.pop %v1407
        %v1550 = vmul.f32 %v1549, %v1407
        %v1551 = vmul.f32 %v1550, %v1549
        %v1552 = vmul.f32 0.5, %v1551
        %v1553 = vsub.f32 1.5, %v1552
        %v1554 = vmul.f32 %v1549, %v1553
        %vm1555 = vweird.f32 %v1407
        %vm1556 = vweird.f32 %v1549
        %vm1557 = vmor %vm1555, %vm1556
        %v1558 = vsel %vm1557, %v1549, %v1554
        %v1559 = vrsqrt.pop %v1408
        %v1560 = vmul.f32 %v1559, %v1408
        %v1561 = vmul.f32 %v1560, %v1559
        %v1562 = vmul.f32 0.5, %v1561
        %v1563 = vsub.f32 1.5, %v1562
        %v1564 = vmul.f32 %v1559, %v1563
        %vm1565 = vweird.f32 %v1408
        %vm1566 = vweird.f32 %v1559
        %vm1567 = vmor %vm1565, %vm1566
        %v1568 = vsel %vm1567, %v1559, %v1564
        %v1569 = vmul.f32 %v1377, %v1418
        %v1570 = vmul.f32 %v1378, %v1428
        %v1571 = vmul.f32 %v1379, %v1438
        %v1572 = vmul.f32 %v1380, %v1448
        %v1573 = vmul.f32 %v1381, %v1458
        %v1574 = vmul.f32 %v1382, %v1468
        %v1575 = vmul.f32 %v1383, %v1478
        %v1576 = vmul.f32 %v1384, %v1488
        %v1577 = vmul.f32 %v1385, %v1498
        %v1578 = vmul.f32 %v1386, %v1508
        %v1579 = vmul.f32 %v1387, %v1518
        %v1580 = vmul.f32 %v1388, %v1528
        %v1581 = vmul.f32 %v1389, %v1538
        %v1582 = vmul.f32 %v1390, %v1548
        %v1583 = vmul.f32 %v1391, %v1558
        %v1584 = vmul.f32 %v1392, %v1568
        %v1585 = vld [vmem:[%s11] sm:$0x1]
        %v1587 = vperm.slane %v1585, 0
        %v1589 = vmul.f32 %v1569, %v1587
        %v1590 = vmul.f32 %v1570, %v1587
        %v1591 = vmul.f32 %v1571, %v1587
        %v1592 = vmul.f32 %v1572, %v1587
        %v1593 = vmul.f32 %v1573, %v1587
        %v1594 = vmul.f32 %v1574, %v1587
        %v1595 = vmul.f32 %v1575, %v1587
        %v1596 = vmul.f32 %v1576, %v1587
        %v1597 = vmul.f32 %v1577, %v1587
        %v1598 = vmul.f32 %v1578, %v1587
        %v1599 = vmul.f32 %v1579, %v1587
        %v1600 = vmul.f32 %v1580, %v1587
        %v1601 = vmul.f32 %v1581, %v1587
        %v1602 = vmul.f32 %v1582, %v1587
        %v1603 = vmul.f32 %v1583, %v1587
        %v1604 = vmul.f32 %v1584, %v1587
        %v1605 = vld [vmem:[%s12] sm:$0x1]
        %v1607 = vperm.slane %v1605, 0
        %v1609 = vadd.f32 %v1589, %v1607
        %v1610 = vadd.f32 %v1590, %v1607
        %v1611 = vadd.f32 %v1591, %v1607
        %v1612 = vadd.f32 %v1592, %v1607
        %v1613 = vadd.f32 %v1593, %v1607
        %v1614 = vadd.f32 %v1594, %v1607
        %v1615 = vadd.f32 %v1595, %v1607
        %v1616 = vadd.f32 %v1596, %v1607
        %v1617 = vadd.f32 %v1597, %v1607
        %v1618 = vadd.f32 %v1598, %v1607
        %v1619 = vadd.f32 %v1599, %v1607
        %v1620 = vadd.f32 %v1600, %v1607
        %v1621 = vadd.f32 %v1601, %v1607
        %v1622 = vadd.f32 %v1602, %v1607
        %v1623 = vadd.f32 %v1603, %v1607
        %v1624 = vadd.f32 %v1604, %v1607
        %v1625 = vld [vmem:[%s654] sm:$0xf]
        %v1626 = vld [vmem:[%s654 + $0x4] sm:$0xf]
        %v1627 = vld [vmem:[%s654 + $0x8] sm:$0xf]
        %v1628 = vld [vmem:[%s654 + $0xc] sm:$0xf]
        %v1629 = vld [vmem:[%s654 + $0x10] sm:$0xf]
        %v1630 = vld [vmem:[%s654 + $0x14] sm:$0xf]
        %v1631 = vld [vmem:[%s654 + $0x18] sm:$0xf]
        %v1632 = vld [vmem:[%s654 + $0x1c] sm:$0xf]
        %v1633 = vld [vmem:[%s654 + $0x20] sm:$0xf]
        %v1634 = vld [vmem:[%s654 + $0x24] sm:$0xf]
        %v1635 = vld [vmem:[%s654 + $0x28] sm:$0xf]
        %v1636 = vld [vmem:[%s654 + $0x2c] sm:$0xf]
        %v1637 = vld [vmem:[%s654 + $0x30] sm:$0xf]
        %v1638 = vld [vmem:[%s654 + $0x34] sm:$0xf]
        %v1639 = vld [vmem:[%s654 + $0x38] sm:$0xf]
        %v1640 = vld [vmem:[%s654 + $0x3c] sm:$0xf]
        %v1641 = vld [vmem:[#allocation14] sm:$0xf]
        %v1642 = vld [vmem:[#allocation14 + $0x4] sm:$0xf]
        %v1643 = vld [vmem:[#allocation14 + $0x8] sm:$0xf]
        %v1644 = vld [vmem:[#allocation14 + $0xc] sm:$0xf]
        %v1645 = vld [vmem:[#allocation14 + $0x10] sm:$0xf]
        %v1646 = vld [vmem:[#allocation14 + $0x14] sm:$0xf]
        %v1647 = vld [vmem:[#allocation14 + $0x18] sm:$0xf]
        %v1648 = vld [vmem:[#allocation14 + $0x1c] sm:$0xf]
        %v1649 = vld [vmem:[#allocation14 + $0x20] sm:$0xf]
        %v1650 = vld [vmem:[#allocation14 + $0x24] sm:$0xf]
        %v1651 = vld [vmem:[#allocation14 + $0x28] sm:$0xf]
        %v1652 = vld [vmem:[#allocation14 + $0x2c] sm:$0xf]
        %v1653 = vld [vmem:[#allocation14 + $0x30] sm:$0xf]
        %v1654 = vld [vmem:[#allocation14 + $0x34] sm:$0xf]
        %v1655 = vld [vmem:[#allocation14 + $0x38] sm:$0xf]
        %v1656 = vld [vmem:[#allocation14 + $0x3c] sm:$0xf]
        %v1657 = vld [vmem:[%s14] sm:$0x1]
        %v1659 = vperm.slane %v1657, 0
        %v1677 = vunpack.c.l.b16 %v1625
        %v1678 = vunpack.c.l.b16 %v1626
        %v1679 = vunpack.c.l.b16 %v1627
        %v1680 = vunpack.c.l.b16 %v1628
        %v1681 = vunpack.c.l.b16 %v1629
        %v1682 = vunpack.c.l.b16 %v1630
        %v1683 = vunpack.c.l.b16 %v1631
        %v1684 = vunpack.c.l.b16 %v1632
        %v1685 = vunpack.c.l.b16 %v1633
        %v1686 = vunpack.c.l.b16 %v1634
        %v1687 = vunpack.c.l.b16 %v1635
        %v1688 = vunpack.c.l.b16 %v1636
        %v1689 = vunpack.c.l.b16 %v1637
        %v1690 = vunpack.c.l.b16 %v1638
        %v1691 = vunpack.c.l.b16 %v1639
        %v1692 = vunpack.c.l.b16 %v1640
        %v1693 = vpack.c.b16 %v1678, %v1677
        %v1694 = vpack.c.b16 %v1680, %v1679
        %v1695 = vpack.c.b16 %v1682, %v1681
        %v1696 = vpack.c.b16 %v1684, %v1683
        %v1697 = vpack.c.b16 %v1686, %v1685
        %v1698 = vpack.c.b16 %v1688, %v1687
        %v1699 = vpack.c.b16 %v1690, %v1689
        %v1700 = vpack.c.b16 %v1692, %v1691
        %v1725 = vunpack.c.l.b16 %v1641
        %v1726 = vunpack.c.l.b16 %v1642
        %v1727 = vunpack.c.l.b16 %v1643
        %v1728 = vunpack.c.l.b16 %v1644
        %v1729 = vunpack.c.l.b16 %v1645
        %v1730 = vunpack.c.l.b16 %v1646
        %v1731 = vunpack.c.l.b16 %v1647
        %v1732 = vunpack.c.l.b16 %v1648
        %v1733 = vunpack.c.l.b16 %v1649
        %v1734 = vunpack.c.l.b16 %v1650
        %v1735 = vunpack.c.l.b16 %v1651
        %v1736 = vunpack.c.l.b16 %v1652
        %v1737 = vunpack.c.l.b16 %v1653
        %v1738 = vunpack.c.l.b16 %v1654
        %v1739 = vunpack.c.l.b16 %v1655
        %v1740 = vunpack.c.l.b16 %v1656
        %v1741 = vpack.c.b16 %v1726, %v1725
        %v1742 = vpack.c.b16 %v1728, %v1727
        %v1743 = vpack.c.b16 %v1730, %v1729
        %v1744 = vpack.c.b16 %v1732, %v1731
        %v1745 = vpack.c.b16 %v1734, %v1733
        %v1746 = vpack.c.b16 %v1736, %v1735
        %v1747 = vpack.c.b16 %v1738, %v1737
        %v1748 = vpack.c.b16 %v1740, %v1739
        %1757 = vmatpush.bf16.msra.mxu0 %v1748
        %1758 = vmatpush.bf16.msra.mxu0 %v1747
        %1759 = vmatpush.bf16.msra.mxu0 %v1746
        %1760 = vmatpush.bf16.msra.mxu0 %v1745
        %1761 = vmatpush.bf16.msra.mxu0 %v1744
        %1762 = vmatpush.bf16.msra.mxu0 %v1743
        %1763 = vmatpush.bf16.msra.mxu0 %v1742
        %1764 = vmatpush.bf16.msra.mxu0 %v1741
        %1765 = vmatmul.bf16.gmra.mxu0 %v1693
        %v1766 = vpop.f32.mrf.mxu0
        %v1767 = vadd.f32 %v1659, %v1766
        %v1768 = vpop.f32.mrf.mxu0
        %v1769 = vadd.f32 %v1659, %v1768
        %1770 = vmatmul.bf16.gmra.mxu0 %v1694
        %v1771 = vpop.f32.mrf.mxu0
        %v1772 = vadd.f32 %v1659, %v1771
        %v1773 = vpop.f32.mrf.mxu0
        %v1774 = vadd.f32 %v1659, %v1773
        %1775 = vmatmul.bf16.gmra.mxu0 %v1695
        %v1776 = vpop.f32.mrf.mxu0
        %v1777 = vadd.f32 %v1659, %v1776
        %v1778 = vpop.f32.mrf.mxu0
        %v1779 = vadd.f32 %v1659, %v1778
        %1780 = vmatmul.bf16.gmra.mxu0 %v1696
        %v1781 = vpop.f32.mrf.mxu0
        %v1782 = vadd.f32 %v1659, %v1781
        %v1783 = vpop.f32.mrf.mxu0
        %v1784 = vadd.f32 %v1659, %v1783
        %1785 = vmatmul.bf16.gmra.mxu0 %v1697
        %v1786 = vpop.f32.mrf.mxu0
        %v1787 = vadd.f32 %v1659, %v1786
        %v1788 = vpop.f32.mrf.mxu0
        %v1789 = vadd.f32 %v1659, %v1788
        %1790 = vmatmul.bf16.gmra.mxu0 %v1698
        %v1791 = vpop.f32.mrf.mxu0
        %v1792 = vadd.f32 %v1659, %v1791
        %v1793 = vpop.f32.mrf.mxu0
        %v1794 = vadd.f32 %v1659, %v1793
        %1795 = vmatmul.bf16.gmra.mxu0 %v1699
        %v1796 = vpop.f32.mrf.mxu0
        %v1797 = vadd.f32 %v1659, %v1796
        %v1798 = vpop.f32.mrf.mxu0
        %v1799 = vadd.f32 %v1659, %v1798
        %1800 = vmatmul.bf16.gmra.mxu0 %v1700
        %v1801 = vpop.f32.mrf.mxu0
        %v1802 = vadd.f32 %v1659, %v1801
        %v1803 = vpop.f32.mrf.mxu0
        %v1804 = vadd.f32 %v1659, %v1803
        %1805 = vdwg.mxu0
        %v1806 = vmax.f32 %v1767, 0.0
        %v1807 = vmax.f32 %v1769, 0.0
        %v1808 = vmax.f32 %v1772, 0.0
        %v1809 = vmax.f32 %v1774, 0.0
        %v1810 = vmax.f32 %v1777, 0.0
        %v1811 = vmax.f32 %v1779, 0.0
        %v1812 = vmax.f32 %v1782, 0.0
        %v1813 = vmax.f32 %v1784, 0.0
        %v1814 = vmax.f32 %v1787, 0.0
        %v1815 = vmax.f32 %v1789, 0.0
        %v1816 = vmax.f32 %v1792, 0.0
        %v1817 = vmax.f32 %v1794, 0.0
        %v1818 = vmax.f32 %v1797, 0.0
        %v1819 = vmax.f32 %v1799, 0.0
        %v1820 = vmax.f32 %v1802, 0.0
        %v1821 = vmax.f32 %v1804, 0.0
        %v1822 = vpack.c.bf16 %v1807, %v1806
        %v1823 = vpack.c.bf16 %v1809, %v1808
        %v1824 = vpack.c.bf16 %v1811, %v1810
        %v1825 = vpack.c.bf16 %v1813, %v1812
        %v1826 = vpack.c.bf16 %v1815, %v1814
        %v1827 = vpack.c.bf16 %v1817, %v1816
        %v1828 = vpack.c.bf16 %v1819, %v1818
        %v1829 = vpack.c.bf16 %v1821, %v1820
        %v1830 = vld [vmem:[#allocation16] sm:$0xf]
        %v1831 = vld [vmem:[#allocation16 + $0x4] sm:$0xf]
        %v1832 = vld [vmem:[#allocation16 + $0x8] sm:$0xf]
        %v1833 = vld [vmem:[#allocation16 + $0xc] sm:$0xf]
        %v1834 = vld [vmem:[#allocation16 + $0x10] sm:$0xf]
        %v1835 = vld [vmem:[#allocation16 + $0x14] sm:$0xf]
        %v1836 = vld [vmem:[#allocation16 + $0x18] sm:$0xf]
        %v1837 = vld [vmem:[#allocation16 + $0x1c] sm:$0xf]
        %v1838 = vld [vmem:[#allocation16 + $0x20] sm:$0xf]
        %v1839 = vld [vmem:[#allocation16 + $0x24] sm:$0xf]
        %v1840 = vld [vmem:[#allocation16 + $0x28] sm:$0xf]
        %v1841 = vld [vmem:[#allocation16 + $0x2c] sm:$0xf]
        %v1842 = vld [vmem:[#allocation16 + $0x30] sm:$0xf]
        %v1843 = vld [vmem:[#allocation16 + $0x34] sm:$0xf]
        %v1844 = vld [vmem:[#allocation16 + $0x38] sm:$0xf]
        %v1845 = vld [vmem:[#allocation16 + $0x3c] sm:$0xf]
        %v1846 = vld [vmem:[%s16] sm:$0x1]
        %v1848 = vperm.slane %v1846, 0
        %v1866 = vunpack.c.l.b16 %v1830
        %v1867 = vunpack.c.l.b16 %v1831
        %v1868 = vunpack.c.l.b16 %v1832
        %v1869 = vunpack.c.l.b16 %v1833
        %v1870 = vunpack.c.l.b16 %v1834
        %v1871 = vunpack.c.l.b16 %v1835
        %v1872 = vunpack.c.l.b16 %v1836
        %v1873 = vunpack.c.l.b16 %v1837
        %v1874 = vunpack.c.l.b16 %v1838
        %v1875 = vunpack.c.l.b16 %v1839
        %v1876 = vunpack.c.l.b16 %v1840
        %v1877 = vunpack.c.l.b16 %v1841
        %v1878 = vunpack.c.l.b16 %v1842
        %v1879 = vunpack.c.l.b16 %v1843
        %v1880 = vunpack.c.l.b16 %v1844
        %v1881 = vunpack.c.l.b16 %v1845
        %v1882 = vpack.c.b16 %v1867, %v1866
        %v1883 = vpack.c.b16 %v1869, %v1868
        %v1884 = vpack.c.b16 %v1871, %v1870
        %v1885 = vpack.c.b16 %v1873, %v1872
        %v1886 = vpack.c.b16 %v1875, %v1874
        %v1887 = vpack.c.b16 %v1877, %v1876
        %v1888 = vpack.c.b16 %v1879, %v1878
        %v1889 = vpack.c.b16 %v1881, %v1880
        %1898 = vmatpush.bf16.msra.mxu0 %v1889
        %1899 = vmatpush.bf16.msra.mxu0 %v1888
        %1900 = vmatpush.bf16.msra.mxu0 %v1887
        %1901 = vmatpush.bf16.msra.mxu0 %v1886
        %1902 = vmatpush.bf16.msra.mxu0 %v1885
        %1903 = vmatpush.bf16.msra.mxu0 %v1884
        %1904 = vmatpush.bf16.msra.mxu0 %v1883
        %1905 = vmatpush.bf16.msra.mxu0 %v1882
        %1906 = vmatmul.bf16.gmra.mxu0 %v1822
        %v1907 = vpop.f32.mrf.mxu0
        %v1908 = vadd.f32 %v1848, %v1907
        %v1909 = vpop.f32.mrf.mxu0
        %v1910 = vadd.f32 %v1848, %v1909
        %1911 = vmatmul.bf16.gmra.mxu0 %v1823
        %v1912 = vpop.f32.mrf.mxu0
        %v1913 = vadd.f32 %v1848, %v1912
        %v1914 = vpop.f32.mrf.mxu0
        %v1915 = vadd.f32 %v1848, %v1914
        %1916 = vmatmul.bf16.gmra.mxu0 %v1824
        %v1917 = vpop.f32.mrf.mxu0
        %v1918 = vadd.f32 %v1848, %v1917
        %v1919 = vpop.f32.mrf.mxu0
        %v1920 = vadd.f32 %v1848, %v1919
        %1921 = vmatmul.bf16.gmra.mxu0 %v1825
        %v1922 = vpop.f32.mrf.mxu0
        %v1923 = vadd.f32 %v1848, %v1922
        %v1924 = vpop.f32.mrf.mxu0
        %v1925 = vadd.f32 %v1848, %v1924
        %1926 = vmatmul.bf16.gmra.mxu0 %v1826
        %v1927 = vpop.f32.mrf.mxu0
        %v1928 = vadd.f32 %v1848, %v1927
        %v1929 = vpop.f32.mrf.mxu0
        %v1930 = vadd.f32 %v1848, %v1929
        %1931 = vmatmul.bf16.gmra.mxu0 %v1827
        %v1932 = vpop.f32.mrf.mxu0
        %v1933 = vadd.f32 %v1848, %v1932
        %v1934 = vpop.f32.mrf.mxu0
        %v1935 = vadd.f32 %v1848, %v1934
        %1936 = vmatmul.bf16.gmra.mxu0 %v1828
        %v1937 = vpop.f32.mrf.mxu0
        %v1938 = vadd.f32 %v1848, %v1937
        %v1939 = vpop.f32.mrf.mxu0
        %v1940 = vadd.f32 %v1848, %v1939
        %1941 = vmatmul.bf16.gmra.mxu0 %v1829
        %v1942 = vpop.f32.mrf.mxu0
        %v1943 = vadd.f32 %v1848, %v1942
        %v1944 = vpop.f32.mrf.mxu0
        %v1945 = vadd.f32 %v1848, %v1944
        %1946 = vdwg.mxu0
        %v1947 = vpack.c.bf16 %v908, %v908
        %v1948 = vpack.c.bf16 %v1609, %v1609
        %v1949 = vpack.c.bf16 %v1610, %v1610
        %v1950 = vpack.c.bf16 %v1611, %v1611
        %v1951 = vpack.c.bf16 %v1612, %v1612
        %v1952 = vpack.c.bf16 %v1613, %v1613
        %v1953 = vpack.c.bf16 %v1614, %v1614
        %v1954 = vpack.c.bf16 %v1615, %v1615
        %v1955 = vpack.c.bf16 %v1616, %v1616
        %v1956 = vpack.c.bf16 %v1617, %v1617
        %v1957 = vpack.c.bf16 %v1618, %v1618
        %v1958 = vpack.c.bf16 %v1619, %v1619
        %v1959 = vpack.c.bf16 %v1620, %v1620
        %v1960 = vpack.c.bf16 %v1621, %v1621
        %v1961 = vpack.c.bf16 %v1622, %v1622
        %v1962 = vpack.c.bf16 %v1623, %v1623
        %v1963 = vpack.c.bf16 %v1624, %v1624
        %v1964 = vpack.c.bf16 %v1908, %v1908
        %v1965 = vpack.c.bf16 %v1910, %v1910
        %v1966 = vpack.c.bf16 %v1913, %v1913
        %v1967 = vpack.c.bf16 %v1915, %v1915
        %v1968 = vpack.c.bf16 %v1918, %v1918
        %v1969 = vpack.c.bf16 %v1920, %v1920
        %v1970 = vpack.c.bf16 %v1923, %v1923
        %v1971 = vpack.c.bf16 %v1925, %v1925
        %v1972 = vpack.c.bf16 %v1928, %v1928
        %v1973 = vpack.c.bf16 %v1930, %v1930
        %v1974 = vpack.c.bf16 %v1933, %v1933
        %v1975 = vpack.c.bf16 %v1935, %v1935
        %v1976 = vpack.c.bf16 %v1938, %v1938
        %v1977 = vpack.c.bf16 %v1940, %v1940
        %v1978 = vpack.c.bf16 %v1943, %v1943
        %v1979 = vpack.c.bf16 %v1945, %v1945
        %v1996 = vunpack.c.l.b16 %v1948
        %v1997 = vunpack.c.l.b16 %v1949
        %v1998 = vunpack.c.l.b16 %v1950
        %v1999 = vunpack.c.l.b16 %v1951
        %v2000 = vunpack.c.l.b16 %v1952
        %v2001 = vunpack.c.l.b16 %v1953
        %v2002 = vunpack.c.l.b16 %v1954
        %v2003 = vunpack.c.l.b16 %v1955
        %v2004 = vunpack.c.l.b16 %v1956
        %v2005 = vunpack.c.l.b16 %v1957
        %v2006 = vunpack.c.l.b16 %v1958
        %v2007 = vunpack.c.l.b16 %v1959
        %v2008 = vunpack.c.l.b16 %v1960
        %v2009 = vunpack.c.l.b16 %v1961
        %v2010 = vunpack.c.l.b16 %v1962
        %v2011 = vunpack.c.l.b16 %v1963
        %v2012 = vpack.c.b16 %v1997, %v1996
        %v2013 = vpack.c.b16 %v1999, %v1998
        %v2014 = vpack.c.b16 %v2001, %v2000
        %v2015 = vpack.c.b16 %v2003, %v2002
        %v2016 = vpack.c.b16 %v2005, %v2004
        %v2017 = vpack.c.b16 %v2007, %v2006
        %v2018 = vpack.c.b16 %v2009, %v2008
        %v2019 = vpack.c.b16 %v2011, %v2010
        %2028 = vmatpush.bf16.msra.mxu0 %v2019
        %2029 = vmatpush.bf16.msra.mxu0 %v2018
        %2030 = vmatpush.bf16.msra.mxu0 %v2017
        %2031 = vmatpush.bf16.msra.mxu0 %v2016
        %2032 = vmatpush.bf16.msra.mxu0 %v2015
        %2033 = vmatpush.bf16.msra.mxu0 %v2014
        %2034 = vmatpush.bf16.msra.mxu0 %v2013
        %2035 = vmatpush.bf16.msra.mxu0 %v2012
        %2036 = vmatmul.bf16.gmra.mxu0 %v1947
        %v2037 = vpop.f32.mrf.mxu0
        %v2038 = vadd.f32 0.0, %v2037
        %v2039 = vpop.f32.mrf.mxu0
        %2040 = vdwg.mxu0
        %v2041 = vpack.c.bf16 %v2038, %v2038
        %v2058 = vunpack.c.l.b16 %v1964
        %v2059 = vunpack.c.l.b16 %v1965
        %v2060 = vunpack.c.l.b16 %v1966
        %v2061 = vunpack.c.l.b16 %v1967
        %v2062 = vunpack.c.l.b16 %v1968
        %v2063 = vunpack.c.l.b16 %v1969
        %v2064 = vunpack.c.l.b16 %v1970
        %v2065 = vunpack.c.l.b16 %v1971
        %v2066 = vunpack.c.l.b16 %v1972
        %v2067 = vunpack.c.l.b16 %v1973
        %v2068 = vunpack.c.l.b16 %v1974
        %v2069 = vunpack.c.l.b16 %v1975
        %v2070 = vunpack.c.l.b16 %v1976
        %v2071 = vunpack.c.l.b16 %v1977
        %v2072 = vunpack.c.l.b16 %v1978
        %v2073 = vunpack.c.l.b16 %v1979
        %v2074 = vpack.c.b16 %v2059, %v2058
        %v2075 = vpack.c.b16 %v2061, %v2060
        %v2076 = vpack.c.b16 %v2063, %v2062
        %v2077 = vpack.c.b16 %v2065, %v2064
        %v2078 = vpack.c.b16 %v2067, %v2066
        %v2079 = vpack.c.b16 %v2069, %v2068
        %v2080 = vpack.c.b16 %v2071, %v2070
        %v2081 = vpack.c.b16 %v2073, %v2072
        %2090 = vmatpush.bf16.msra.mxu0 %v2081
        %2091 = vmatpush.bf16.msra.mxu0 %v2080
        %2092 = vmatpush.bf16.msra.mxu0 %v2079
        %2093 = vmatpush.bf16.msra.mxu0 %v2078
        %2094 = vmatpush.bf16.msra.mxu0 %v2077
        %2095 = vmatpush.bf16.msra.mxu0 %v2076
        %2096 = vmatpush.bf16.msra.mxu0 %v2075
        %2097 = vmatpush.bf16.msra.mxu0 %v2074
        %2098 = vmatmul.bf16.gmra.mxu0 %v2041
        %v2099 = vpop.f32.mrf.mxu0
        %v2100 = vadd.f32 0.0, %v2099
        %v2101 = vpop.f32.mrf.mxu0
        %2102 = vdwg.mxu0
        %2103 = vst [vmem:[%s745] sm:$0xff] %v2100
        %s2104 = sand.u32 %s420, 1
        %s2105 = scalar_lea.sflag [#allocation4], %s2104
        %s2106 = sand.u32 %s420, 1
        %s2107 = smul.addr %s2106, 8
        %s2108 = scalar_lea.vmem [#allocation17], %s2107
        // Predicated region
        $region125: #{tpu_custom_call.1} parent=87 // pred_check
          %p2109 = pneg %p430
        $region126: #{tpu_custom_call.1} parent=87 // pred_check_branch
          %2111 = sbr.rel (%p2109) target = $region128
        $region127: #{tpu_custom_call.1} parent=87 // pred_region
          %2113 = vsyncadd %s2105, 0
          %s2114 = smul.addr %s40, 8
          %s2115 = scalar_lea.hbm %s17, %s2114
          %s2117 = sshll.u32 %s2108, 4
          %s2118 = int_to_ptr.vmem [resolvable:$true] %s2117
          %s2119 = sshll.u32 %s2115, 4
          %s2120 = int_to_ptr.hbm [resolvable:$true] %s2119
          %2122 = dma.vmem_to_hbm [thread:$0]  %s2118, 128, %s2120, %s2105
        $region128: #{tpu_custom_call.1} parent=87 // pred_fallthru
          _
      $region88: #{tpu_custom_call.1} parent=5 // pred_fallthru
        _
      %p2123 = scmp.le.s32.totalorder 2, %s35
      // Predicated region
      $region129: #{tpu_custom_call.1} parent=5 // pred_check
        %p2124 = pneg %p2123
      $region130: #{tpu_custom_call.1} parent=5 // pred_check_branch
        %2126 = sbr.rel (%p2124) target = $region132
      $region131: #{tpu_custom_call.1} parent=5 // pred_region
        %s2127 = ssub.s32 %s35, 2
        // Predicated region
        $region133: #{tpu_custom_call.1} parent=131 // pred_check
          %p2128 = pneg %p436
        $region134: #{tpu_custom_call.1} parent=131 // pred_check_branch
          %2130 = sbr.rel (%p2128) target = $region136
        $region135: #{tpu_custom_call.1} parent=131 // pred_region
          %s2131 = sand.u32 %s421, 1
          %s2132 = scalar_lea.sflag [#allocation4], %s2131
          %s2133 = sand.u32 %s421, 1
          %s2134 = smul.addr %s2133, 8
          %s2135 = scalar_lea.vmem [#allocation17], %s2134
          %2137 = dma.done %s2132, 128
        $region136: #{tpu_custom_call.1} parent=131 // pred_fallthru
          _
      $region132: #{tpu_custom_call.1} parent=5 // pred_fallthru
        _
    $region6: #{tpu_custom_call.1} parent=1 // loop_footer
      %s39 = sadd.s32 1, %s35
    $region7: #{tpu_custom_call.1} parent=1 // loop_footer_branch
      %34 = sbr.rel target = $region3
    $region8: #{tpu_custom_call.1} parent=1 // loop_exit
      _
    %2138 = vsyncpa [#allocation3], 1
    %s2139 = scalar_lea.sflag [#allocation3], 1
    %2140 = vsyncpa %s2139, 1
    %2141 = vsyncpa [#allocation6], 1
    %s2142 = scalar_lea.sflag [#allocation6], 1
    %2143 = vsyncpa %s2142, 1
    %2144 = vsyncpa [#allocation9], 1
    %2145 = vsyncpa [#allocation12], 1
    %2146 = vsyncpa [#allocation15], 1
    %2147 = vsyncpa [#allocation4], 1
    %s2148 = scalar_lea.sflag [#allocation4], 1
    %2149 = vsyncpa %s2148, 1

</llo_original>
